<compile_context>
chip_gen: v6e
topology: v6e:2x2x1
jax: 0.10.0
libtpu: 0.0.40
codegen_flags: <defaults>
</compile_context>

<pallas_src>
import functools

import jax
import jax.numpy as jnp
from jax.experimental import pallas as pl
from jax.experimental.pallas import tpu as pltpu


# Tap order k = ky*3 + kx, offsets (oy, ox) = (ky-1, kx-1); matches the weight
# reshape in _prepare (column index = ky*3*C + kx*C + c_in).
_TAPS = tuple((oy, ox) for oy in (-1, 0, 1) for ox in (-1, 0, 1))


# ----------------------------------------------------------------------------
# Fused Pallas kernel: whole BNet forward for one batch element.
# ----------------------------------------------------------------------------
def _bnet_kernel(x_ref, w_ref, s_ref, t_ref, o_ref, patch_ref, *,
                 H, W, C, num_block):
    # x_ref:     (1, C, H*W)     input activation (flattened NCHW), f32
    # w_ref:     (S, C, 9*C)     transposed im2col conv weights, bf16, S=2*num_block
    # s_ref:     (1, S, C, 1)    folded FiLM+BN scale for this sample, f32
    # t_ref:     (1, S, C, 1)    folded FiLM+BN shift for this sample, f32
    # o_ref:     (1, C, H*W)     output, f32
    # patch_ref: (9*C, H*W) VMEM im2col patches scratch (f32; cast to bf16 at dot)
    f32 = jnp.float32
    HW = H * W

    # Column-boundary masks, computed once and reused by every conv step.  The
    # flat lane shift below zero-fills row over/underflow, so only horizontal
    # wrap-around (col 0 for ox=-1, col W-1 for ox=+1) needs masking.
    col = jax.lax.broadcasted_iota(jnp.int32, (1, HW), 1) % W
    col_ok = {-1: col >= 1, 0: None, 1: col < (W - 1)}

    def shift_flat(v, delta):
        # shifted[:, p] = v[:, p + delta] if 0 <= p + delta < HW else 0.
        # TODO(synk): pltpu.roll (XLU slot) + masks is an alternative; at
        # (C, HW) = 2 vregs per activation the explicit slice+zero concat is a wash.
        if delta == 0:
            return v
        zeros = jnp.zeros((C, abs(delta)), v.dtype)
        if delta > 0:
            return jnp.concatenate([v[:, delta:], zeros], axis=1)
        return jnp.concatenate([zeros, v[:, :HW + delta]], axis=1)

    def tconv(act, step):
        # act: (C, HW) f32, channels on sublanes, pixels on lanes (lane-dense).
        # Build the transposed im2col matrix tap-by-tap (sublane-aligned stores),
        # do ONE bf16 MXU matmul with f32 accumulation, then the folded
        # FiLM+BN affine in f32.
        for k, (oy, ox) in enumerate(_TAPS):
            tap = shift_flat(act, oy * W + ox)
            if col_ok[ox] is not None:
                tap = jnp.where(col_ok[ox], tap, 0.0)
            patch_ref[k * C:(k + 1) * C, :] = tap
        y = jnp.dot(w_ref[step], patch_ref[...].astype(jnp.bfloat16),
                    preferred_element_type=f32)                       # (C, HW)
        return y * s_ref[0, step] + t_ref[0, step]

    x = x_ref[0].astype(f32)                                          # (C, HW)
    # TODO(synk): at realistic num_block, replace the static Python loop with
    # lax.fori_loop (activation carry, dynamic w_ref[step]) so vreg live ranges
    # stay bounded and per-step weights can be streamed instead of held resident.
    for b in range(num_block):
        # BaseBlock: mid = relu(bn1(conv1(x)))
        mid = jnp.maximum(tconv(x, 2 * b), 0.0)
        # BNet:      x = relu(x + bn2(conv2(mid)))
        x = jnp.maximum(x + tconv(mid, 2 * b + 1), 0.0)

    o_ref[0] = x.astype(o_ref.dtype)


# ----------------------------------------------------------------------------
# Parameter folding (one batched op for the whole network, plain-JAX glue)
# ----------------------------------------------------------------------------
def _prepare(params, tran_x, eps=1e-5):
    """Fold FiLM (Linear(tran_x)) + eval-mode BatchNorm into per-(n, step, c)
    scale/shift, and reshape conv weights to transposed im2col form (S, C, 9C)."""
    S, C = params["gamma"].shape
    film = jnp.einsum("nd,scd->nsc", tran_x, params["fc_w"]) + params["fc_b"][None]
    sc, sh = film[..., :C], film[..., C:]
    a = params["gamma"] / jnp.sqrt(params["var"] + eps)               # (S, C)
    b = params["beta"] - a * params["mean"]
    s_all = (a[None] * (1.0 + sc)).astype(jnp.float32)[..., None]     # (N, S, C, 1)
    t_all = (a[None] * sh + b[None]).astype(jnp.float32)[..., None]   # (N, S, C, 1)
    # torch conv weight (S, C_out, C_in, kH, kW) -> (S, C_out, kH, kW, C_in)
    # -> (S, C_out, 9*C_in); column index = ky*3*C + kx*C + c_in (matches _TAPS).
    w_all = jnp.transpose(params["w"], (0, 1, 3, 4, 2)).reshape(S, C, 9 * C)
    return w_all, s_all, t_all


def init_params(key, num_channel, num_block, dim_in):
    C = num_channel + 3                     # BNet: channels = num_channel + 3
    S = 2 * num_block                       # two TConv+BN pairs per BaseBlock
    ks = jax.random.split(key, 7)
    return dict(
        w=0.1 * jax.random.normal(ks[0], (S, C, C, 3, 3), jnp.float32),   # torch layout
        fc_w=0.1 * jax.random.normal(ks[1], (S, 2 * C, dim_in), jnp.float32),
        fc_b=0.05 * jax.random.normal(ks[2], (S, 2 * C), jnp.float32),
        gamma=1.0 + 0.1 * jax.random.normal(ks[3], (S, C), jnp.float32),
        beta=0.1 * jax.random.normal(ks[4], (S, C), jnp.float32),
        mean=0.1 * jax.random.normal(ks[5], (S, C), jnp.float32),
        var=1.0 + 0.1 * jnp.abs(jax.random.normal(ks[6], (S, C), jnp.float32)),
    )


# ----------------------------------------------------------------------------
# BNet forward (single pallas_call) and pure-JAX references
# ----------------------------------------------------------------------------
def bnet_forward(x_nchw, tran_x, params, mode="normal"):
    # TODO(synk): only mode='normal' is implemented (TConv 'mode' branch unknown).
    del mode
    w_all, s_all, t_all = _prepare(params, tran_x)
    N, C, H, W = x_nchw.shape
    HW = H * W
    S = w_all.shape[0]
    num_block = S // 2
    x = x_nchw.reshape(N, C, HW).astype(jnp.float32)    # free reshape, no relayout

    kernel = functools.partial(_bnet_kernel, H=H, W=W, C=C, num_block=num_block)
    # TODO(synk): for real RCDNet frame sizes, strip-tile H with a 2*num_block-row
    # recompute halo (or a per-block "arbitrary" grid axis), add a second
    # "parallel" spatial grid axis so both v7x TensorCores get work at small N,
    # and set pltpu.CompilerParams(vmem_limit_bytes=...) for v7x's 64 MiB VMEM.
    out = pl.pallas_call(
        kernel,
        out_shape=jax.ShapeDtypeStruct((N, C, HW), jnp.float32),
        grid_spec=pltpu.PrefetchScalarGridSpec(
            num_scalar_prefetch=0,
            grid=(N,),
            in_specs=[
                pl.BlockSpec((1, C, HW), lambda n: (n, 0, 0)),        # activation
                pl.BlockSpec((S, C, 9 * C), lambda n: (0, 0, 0)),     # weights (resident)
                pl.BlockSpec((1, S, C, 1), lambda n: (n, 0, 0, 0)),   # FiLM+BN scale
                pl.BlockSpec((1, S, C, 1), lambda n: (n, 0, 0, 0)),   # FiLM+BN shift
            ],
            out_specs=pl.BlockSpec((1, C, HW), lambda n: (n, 0, 0)),
            scratch_shapes=[pltpu.VMEM((9 * C, HW), jnp.float32)],
        ),
        compiler_params=pltpu.CompilerParams(dimension_semantics=("parallel",)),
    )(x, w_all.astype(jnp.bfloat16), s_all, t_all)
    return out.reshape(N, C, H, W)


def bnet_forward_ref(x_nchw, tran_x, params, mxu_dtype=jnp.bfloat16):
    """Pure-JAX reference.  mxu_dtype=bf16 replicates the kernel's MXU-input
    rounding; mxu_dtype=f32 (with highest precision) is the true-f32 reference."""
    w_all, s_all, t_all = _prepare(params, tran_x)
    N, C, H, W = x_nchw.shape
    x = x_nchw.astype(jnp.float32)
    S = w_all.shape[0]

    def tconv(inp, step):                                             # (N, C, H, W)
        xp = jnp.pad(inp, ((0, 0), (0, 0), (1, 1), (1, 1)))
        cols = [xp[:, :, dy:dy + H, dx:dx + W] for dy in range(3) for dx in range(3)]
        patches = jnp.stack(cols, axis=1).reshape(N, 9 * C, H * W).astype(mxu_dtype)
        y = jnp.einsum("ck,nkp->ncp", w_all[step].astype(mxu_dtype), patches,
                       preferred_element_type=jnp.float32,
                       precision="highest").reshape(N, C, H, W)
        return (y * s_all[:, step].reshape(N, C, 1, 1)
                + t_all[:, step].reshape(N, C, 1, 1))

    for b in range(S // 2):
        mid = jnp.maximum(tconv(x, 2 * b), 0.0)
        x = jnp.maximum(x + tconv(mid, 2 * b + 1), 0.0)
    return x


if __name__ == "__main__":
    num_channel, num_block, dim_in = 5, 2, 32
    C = num_channel + 3                                  # 8 channels inside BNet
    N, H, W = 2, 16, 16

    key = jax.random.PRNGKey(0)
    kx, kt, kp = jax.random.split(key, 3)
    x = jax.random.normal(kx, (N, C, H, W), jnp.float32)        # NCHW (PyTorch)
    tran_x = jax.random.normal(kt, (N, dim_in), jnp.float32)    # conditioning vector
    params = init_params(kp, num_channel, num_block, dim_in)

    fwd = jax.jit(bnet_forward, static_argnames=("mode",))
    out = jax.block_until_ready(fwd(x, tran_x, params))
    ref_bf16 = jax.block_until_ready(bnet_forward_ref(x, tran_x, params, jnp.bfloat16))
    ref_f32 = jax.block_until_ready(bnet_forward_ref(x, tran_x, params, jnp.float32))

    assert out.shape == (N, C, H, W)
    assert bool(jnp.all(jnp.isfinite(out)))
    # Against a reference with identical bf16 MXU-input rounding: tight.
    err_bf16 = float(jnp.max(jnp.abs(out - ref_bf16)))
    assert err_bf16 < 2e-2, err_bf16
    # Against the true-f32 reference: documented bf16 tolerance (relative to max).
    denom = max(float(jnp.max(jnp.abs(ref_f32))), 1.0)
    err_f32 = float(jnp.max(jnp.abs(out - ref_f32)))
    assert err_f32 / denom < 5e-2, (err_f32, denom)
    print("KERNEL_OK")
</pallas_src>

<mosaic_0001>
module attributes {stable_mosaic.version = 11 : i64} {
  func.func @_bnet_kernel(%arg0: i32, %arg1: memref<1x8x256xf32, #tpu.memory_space<vmem>>, %arg2: memref<4x8x72xbf16, #tpu.memory_space<vmem>>, %arg3: memref<1x4x8x1xf32, #tpu.memory_space<vmem>>, %arg4: memref<1x4x8x1xf32, #tpu.memory_space<vmem>>, %arg5: memref<1x8x256xf32, #tpu.memory_space<vmem>>, %arg6: memref<72x256xf32, #tpu.memory_space<vmem>>) attributes {dimension_semantics = [#tpu.dimension_semantics<parallel>], iteration_bounds = array<i64: 2>, scalar_prefetch = 0 : i64, scratch_operands = 1 : i64, tpu.core_type = #tpu.core_type<tc>, window_params = [{transform_indices = @transform_0, window_bounds = array<i64: 1, 8, 256>}, {pipeline_mode = #tpu.pipeline_mode<synchronous>, transform_indices = @transform_1, window_bounds = array<i64: 4, 8, 72>}, {transform_indices = @transform_2, window_bounds = array<i64: 1, 4, 8, 1>}, {transform_indices = @transform_3, window_bounds = array<i64: 1, 4, 8, 1>}, {transform_indices = @transform_4, window_bounds = array<i64: 1, 8, 256>}]} {
    %0 = tpu.iota {dimensions = array<i32: 1>} : vector<1x256xi32>
    %c16_i32 = arith.constant 16 : i32
    %c0_i32 = arith.constant 0 : i32
    %1 = arith.cmpi eq, %c16_i32, %c0_i32 : i32
    %c1_i32 = arith.constant 1 : i32
    %2 = arith.select %1, %c1_i32, %c16_i32 : i32
    %3 = vector.broadcast %2 : i32 to vector<1x256xi32>
    %4 = arith.remsi %0, %3 : vector<1x256xi32>
    %c0_i32_0 = arith.constant 0 : i32
    %5 = vector.broadcast %c0_i32_0 : i32 to vector<1x256xi32>
    %6 = arith.cmpi ne, %4, %5 : vector<1x256xi32>
    %c0_i32_1 = arith.constant 0 : i32
    %7 = vector.broadcast %c0_i32_1 : i32 to vector<1x256xi32>
    %8 = arith.cmpi slt, %4, %7 : vector<1x256xi32>
    %c0_i32_2 = arith.constant 0 : i32
    %9 = arith.cmpi slt, %2, %c0_i32_2 : i32
    %10 = vector.broadcast %9 : i1 to vector<1x256xi1>
    %11 = vector.broadcast %10 : vector<1x256xi1> to vector<1x256xi1>
    %12 = arith.xori %8, %11 : vector<1x256xi1>
    %13 = arith.andi %12, %6 : vector<1x256xi1>
    %14 = vector.broadcast %2 : i32 to vector<1x256xi32>
    %15 = arith.addi %4, %14 : vector<1x256xi32>
    %16 = arith.select %13, %15, %4 : vector<1x256xi1>, vector<1x256xi32>
    %c1_i32_3 = arith.constant 1 : i32
    %17 = vector.broadcast %c1_i32_3 : i32 to vector<1x256xi32>
    %18 = arith.cmpi sge, %16, %17 : vector<1x256xi32>
    %c15_i32 = arith.constant 15 : i32
    %19 = vector.broadcast %c15_i32 : i32 to vector<1x256xi32>
    %20 = arith.cmpi slt, %16, %19 : vector<1x256xi32>
    %c0 = arith.constant 0 : index
    %c0_4 = arith.constant 0 : index
    %c0_5 = arith.constant 0 : index
    %21 = vector.load %arg1[%c0, %c0_4, %c0_5] : memref<1x8x256xf32, #tpu.memory_space<vmem>>, vector<1x8x256xf32>
    %22 = vector.shape_cast %21 : vector<1x8x256xf32> to vector<8x256xf32>
    %cst = arith.constant 0.000000e+00 : f32
    %23 = vector.broadcast %cst : f32 to vector<8x17xf32>
    %24 = vector.extract_strided_slice %22 {offsets = [0, 0], sizes = [8, 239], strides = [1, 1]} : vector<8x256xf32> to vector<8x239xf32>
    %25 = tpu.concatenate %23, %24 in 1 : vector<8x17xf32>, vector<8x239xf32> -> vector<8x256xf32>
    %cst_6 = arith.constant 0.000000e+00 : f32
    %26 = vector.shape_cast %18 : vector<1x256xi1> to vector<1x256xi1>
    %27 = vector.broadcast %26 : vector<1x256xi1> to vector<8x256xi1>
    %28 = vector.broadcast %cst_6 : f32 to vector<8x256xf32>
    %29 = arith.select %27, %25, %28 : vector<8x256xi1>, vector<8x256xf32>
    %c0_7 = arith.constant 0 : index
    %c0_8 = arith.constant 0 : index
    %30 = vector.load %arg6[%c0_7, %c0_8] : memref<72x256xf32, #tpu.memory_space<vmem>>, vector<8x256xf32>
    tpu.vector_store %arg6[%c0_7, %c0_8], %29 {strides = array<i32>} : memref<72x256xf32, #tpu.memory_space<vmem>>, vector<8x256xf32>,
    %cst_9 = arith.constant 0.000000e+00 : f32
    %31 = vector.broadcast %cst_9 : f32 to vector<8x16xf32>
    %32 = vector.extract_strided_slice %22 {offsets = [0, 0], sizes = [8, 240], strides = [1, 1]} : vector<8x256xf32> to vector<8x240xf32>
    %33 = tpu.concatenate %31, %32 in 1 : vector<8x16xf32>, vector<8x240xf32> -> vector<8x256xf32>
    %c8 = arith.constant 8 : index
    %c0_10 = arith.constant 0 : index
    %34 = vector.load %arg6[%c8, %c0_10] : memref<72x256xf32, #tpu.memory_space<vmem>>, vector<8x256xf32>
    tpu.vector_store %arg6[%c8, %c0_10], %33 {strides = array<i32>} : memref<72x256xf32, #tpu.memory_space<vmem>>, vector<8x256xf32>,
    %cst_11 = arith.constant 0.000000e+00 : f32
    %35 = vector.broadcast %cst_11 : f32 to vector<8x15xf32>
    %36 = vector.extract_strided_slice %22 {offsets = [0, 0], sizes = [8, 241], strides = [1, 1]} : vector<8x256xf32> to vector<8x241xf32>
    %37 = tpu.concatenate %35, %36 in 1 : vector<8x15xf32>, vector<8x241xf32> -> vector<8x256xf32>
    %cst_12 = arith.constant 0.000000e+00 : f32
    %38 = vector.shape_cast %20 : vector<1x256xi1> to vector<1x256xi1>
    %39 = vector.broadcast %38 : vector<1x256xi1> to vector<8x256xi1>
    %40 = vector.broadcast %cst_12 : f32 to vector<8x256xf32>
    %41 = arith.select %39, %37, %40 : vector<8x256xi1>, vector<8x256xf32>
    %c16 = arith.constant 16 : index
    %c0_13 = arith.constant 0 : index
    %42 = vector.load %arg6[%c16, %c0_13] : memref<72x256xf32, #tpu.memory_space<vmem>>, vector<8x256xf32>
    tpu.vector_store %arg6[%c16, %c0_13], %41 {strides = array<i32>} : memref<72x256xf32, #tpu.memory_space<vmem>>, vector<8x256xf32>,
    %cst_14 = arith.constant 0.000000e+00 : f32
    %43 = vector.broadcast %cst_14 : f32 to vector<8x1xf32>
    %44 = vector.extract_strided_slice %22 {offsets = [0, 0], sizes = [8, 255], strides = [1, 1]} : vector<8x256xf32> to vector<8x255xf32>
    %45 = tpu.concatenate %43, %44 in 1 : vector<8x1xf32>, vector<8x255xf32> -> vector<8x256xf32>
    %cst_15 = arith.constant 0.000000e+00 : f32
    %46 = vector.shape_cast %18 : vector<1x256xi1> to vector<1x256xi1>
    %47 = vector.broadcast %46 : vector<1x256xi1> to vector<8x256xi1>
    %48 = vector.broadcast %cst_15 : f32 to vector<8x256xf32>
    %49 = arith.select %47, %45, %48 : vector<8x256xi1>, vector<8x256xf32>
    %c24 = arith.constant 24 : index
    %c0_16 = arith.constant 0 : index
    %50 = vector.load %arg6[%c24, %c0_16] : memref<72x256xf32, #tpu.memory_space<vmem>>, vector<8x256xf32>
    tpu.vector_store %arg6[%c24, %c0_16], %49 {strides = array<i32>} : memref<72x256xf32, #tpu.memory_space<vmem>>, vector<8x256xf32>,
    %c32 = arith.constant 32 : index
    %c0_17 = arith.constant 0 : index
    %51 = vector.load %arg6[%c32, %c0_17] : memref<72x256xf32, #tpu.memory_space<vmem>>, vector<8x256xf32>
    tpu.vector_store %arg6[%c32, %c0_17], %22 {strides = array<i32>} : memref<72x256xf32, #tpu.memory_space<vmem>>, vector<8x256xf32>,
    %cst_18 = arith.constant 0.000000e+00 : f32
    %52 = vector.broadcast %cst_18 : f32 to vector<8x1xf32>
    %53 = vector.extract_strided_slice %22 {offsets = [0, 1], sizes = [8, 255], strides = [1, 1]} : vector<8x256xf32> to vector<8x255xf32>
    %54 = tpu.concatenate %53, %52 in 1 : vector<8x255xf32>, vector<8x1xf32> -> vector<8x256xf32>
    %cst_19 = arith.constant 0.000000e+00 : f32
    %55 = vector.shape_cast %20 : vector<1x256xi1> to vector<1x256xi1>
    %56 = vector.broadcast %55 : vector<1x256xi1> to vector<8x256xi1>
    %57 = vector.broadcast %cst_19 : f32 to vector<8x256xf32>
    %58 = arith.select %56, %54, %57 : vector<8x256xi1>, vector<8x256xf32>
    %c40 = arith.constant 40 : index
    %c0_20 = arith.constant 0 : index
    %59 = vector.load %arg6[%c40, %c0_20] : memref<72x256xf32, #tpu.memory_space<vmem>>, vector<8x256xf32>
    tpu.vector_store %arg6[%c40, %c0_20], %58 {strides = array<i32>} : memref<72x256xf32, #tpu.memory_space<vmem>>, vector<8x256xf32>,
    %cst_21 = arith.constant 0.000000e+00 : f32
    %60 = vector.broadcast %cst_21 : f32 to vector<8x15xf32>
    %61 = vector.extract_strided_slice %22 {offsets = [0, 15], sizes = [8, 241], strides = [1, 1]} : vector<8x256xf32> to vector<8x241xf32>
    %62 = tpu.concatenate %61, %60 in 1 : vector<8x241xf32>, vector<8x15xf32> -> vector<8x256xf32>
    %cst_22 = arith.constant 0.000000e+00 : f32
    %63 = vector.shape_cast %18 : vector<1x256xi1> to vector<1x256xi1>
    %64 = vector.broadcast %63 : vector<1x256xi1> to vector<8x256xi1>
    %65 = vector.broadcast %cst_22 : f32 to vector<8x256xf32>
    %66 = arith.select %64, %62, %65 : vector<8x256xi1>, vector<8x256xf32>
    %c48 = arith.constant 48 : index
    %c0_23 = arith.constant 0 : index
    %67 = vector.load %arg6[%c48, %c0_23] : memref<72x256xf32, #tpu.memory_space<vmem>>, vector<8x256xf32>
    tpu.vector_store %arg6[%c48, %c0_23], %66 {strides = array<i32>} : memref<72x256xf32, #tpu.memory_space<vmem>>, vector<8x256xf32>,
    %cst_24 = arith.constant 0.000000e+00 : f32
    %68 = vector.broadcast %cst_24 : f32 to vector<8x16xf32>
    %69 = vector.extract_strided_slice %22 {offsets = [0, 16], sizes = [8, 240], strides = [1, 1]} : vector<8x256xf32> to vector<8x240xf32>
    %70 = tpu.concatenate %69, %68 in 1 : vector<8x240xf32>, vector<8x16xf32> -> vector<8x256xf32>
    %c56 = arith.constant 56 : index
    %c0_25 = arith.constant 0 : index
    %71 = vector.load %arg6[%c56, %c0_25] : memref<72x256xf32, #tpu.memory_space<vmem>>, vector<8x256xf32>
    tpu.vector_store %arg6[%c56, %c0_25], %70 {strides = array<i32>} : memref<72x256xf32, #tpu.memory_space<vmem>>, vector<8x256xf32>,
    %cst_26 = arith.constant 0.000000e+00 : f32
    %72 = vector.broadcast %cst_26 : f32 to vector<8x17xf32>
    %73 = vector.extract_strided_slice %22 {offsets = [0, 17], sizes = [8, 239], strides = [1, 1]} : vector<8x256xf32> to vector<8x239xf32>
    %74 = tpu.concatenate %73, %72 in 1 : vector<8x239xf32>, vector<8x17xf32> -> vector<8x256xf32>
    %cst_27 = arith.constant 0.000000e+00 : f32
    %75 = vector.shape_cast %20 : vector<1x256xi1> to vector<1x256xi1>
    %76 = vector.broadcast %75 : vector<1x256xi1> to vector<8x256xi1>
    %77 = vector.broadcast %cst_27 : f32 to vector<8x256xf32>
    %78 = arith.select %76, %74, %77 : vector<8x256xi1>, vector<8x256xf32>
    %c64 = arith.constant 64 : index
    %c0_28 = arith.constant 0 : index
    %79 = vector.load %arg6[%c64, %c0_28] : memref<72x256xf32, #tpu.memory_space<vmem>>, vector<8x256xf32>
    tpu.vector_store %arg6[%c64, %c0_28], %78 {strides = array<i32>} : memref<72x256xf32, #tpu.memory_space<vmem>>, vector<8x256xf32>,
    %c0_29 = arith.constant 0 : index
    %c0_30 = arith.constant 0 : index
    %c0_31 = arith.constant 0 : index
    %80 = vector.load %arg2[%c0_29, %c0_30, %c0_31] : memref<4x8x72xbf16, #tpu.memory_space<vmem>>, vector<1x8x72xbf16>
    %81 = vector.shape_cast %80 : vector<1x8x72xbf16> to vector<8x72xbf16>
    %c0_32 = arith.constant 0 : index
    %c0_33 = arith.constant 0 : index
    %82 = vector.load %arg6[%c0_32, %c0_33] : memref<72x256xf32, #tpu.memory_space<vmem>>, vector<72x256xf32>
    %83 = arith.truncf %82 : vector<72x256xf32> to vector<72x256xbf16>
    %cst_34 = arith.constant dense<0.000000e+00> : vector<8x256xf32>
    %84 = tpu.matmul %81, %83, %cst_34 {dimension_numbers = #tpu.dot_dimension_numbers<[1], [0], [0], [1], [0, 0, 1, 1], [], []>} : vector<8x72xbf16>, vector<72x256xbf16>, vector<8x256xf32> -> vector<8x256xf32>
    %c0_35 = arith.constant 0 : index
    %c0_36 = arith.constant 0 : index
    %c0_37 = arith.constant 0 : index
    %c0_38 = arith.constant 0 : index
    %85 = vector.load %arg3[%c0_35, %c0_36, %c0_37, %c0_38] : memref<1x4x8x1xf32, #tpu.memory_space<vmem>>, vector<1x1x8x1xf32>
    %86 = vector.shape_cast %85 : vector<1x1x8x1xf32> to vector<8x1xf32>
    %87 = vector.broadcast %86 : vector<8x1xf32> to vector<8x256xf32>
    %88 = arith.mulf %84, %87 : vector<8x256xf32>
    %c0_39 = arith.constant 0 : index
    %c0_40 = arith.constant 0 : index
    %c0_41 = arith.constant 0 : index
    %c0_42 = arith.constant 0 : index
    %89 = vector.load %arg4[%c0_39, %c0_40, %c0_41, %c0_42] : memref<1x4x8x1xf32, #tpu.memory_space<vmem>>, vector<1x1x8x1xf32>
    %90 = vector.shape_cast %89 : vector<1x1x8x1xf32> to vector<8x1xf32>
    %91 = vector.broadcast %90 : vector<8x1xf32> to vector<8x256xf32>
    %92 = arith.addf %88, %91 : vector<8x256xf32>
    %cst_43 = arith.constant 0.000000e+00 : f32
    %93 = vector.broadcast %cst_43 : f32 to vector<8x256xf32>
    %94 = arith.maximumf %92, %93 : vector<8x256xf32>
    %cst_44 = arith.constant 0.000000e+00 : f32
    %95 = vector.broadcast %cst_44 : f32 to vector<8x17xf32>
    %96 = vector.extract_strided_slice %94 {offsets = [0, 0], sizes = [8, 239], strides = [1, 1]} : vector<8x256xf32> to vector<8x239xf32>
    %97 = tpu.concatenate %95, %96 in 1 : vector<8x17xf32>, vector<8x239xf32> -> vector<8x256xf32>
    %cst_45 = arith.constant 0.000000e+00 : f32
    %98 = vector.shape_cast %18 : vector<1x256xi1> to vector<1x256xi1>
    %99 = vector.broadcast %98 : vector<1x256xi1> to vector<8x256xi1>
    %100 = vector.broadcast %cst_45 : f32 to vector<8x256xf32>
    %101 = arith.select %99, %97, %100 : vector<8x256xi1>, vector<8x256xf32>
    %c0_46 = arith.constant 0 : index
    %c0_47 = arith.constant 0 : index
    %102 = vector.load %arg6[%c0_46, %c0_47] : memref<72x256xf32, #tpu.memory_space<vmem>>, vector<8x256xf32>
    tpu.vector_store %arg6[%c0_46, %c0_47], %101 {strides = array<i32>} : memref<72x256xf32, #tpu.memory_space<vmem>>, vector<8x256xf32>,
    %cst_48 = arith.constant 0.000000e+00 : f32
    %103 = vector.broadcast %cst_48 : f32 to vector<8x16xf32>
    %104 = vector.extract_strided_slice %94 {offsets = [0, 0], sizes = [8, 240], strides = [1, 1]} : vector<8x256xf32> to vector<8x240xf32>
    %105 = tpu.concatenate %103, %104 in 1 : vector<8x16xf32>, vector<8x240xf32> -> vector<8x256xf32>
    %c8_49 = arith.constant 8 : index
    %c0_50 = arith.constant 0 : index
    %106 = vector.load %arg6[%c8_49, %c0_50] : memref<72x256xf32, #tpu.memory_space<vmem>>, vector<8x256xf32>
    tpu.vector_store %arg6[%c8_49, %c0_50], %105 {strides = array<i32>} : memref<72x256xf32, #tpu.memory_space<vmem>>, vector<8x256xf32>,
    %cst_51 = arith.constant 0.000000e+00 : f32
    %107 = vector.broadcast %cst_51 : f32 to vector<8x15xf32>
    %108 = vector.extract_strided_slice %94 {offsets = [0, 0], sizes = [8, 241], strides = [1, 1]} : vector<8x256xf32> to vector<8x241xf32>
    %109 = tpu.concatenate %107, %108 in 1 : vector<8x15xf32>, vector<8x241xf32> -> vector<8x256xf32>
    %cst_52 = arith.constant 0.000000e+00 : f32
    %110 = vector.shape_cast %20 : vector<1x256xi1> to vector<1x256xi1>
    %111 = vector.broadcast %110 : vector<1x256xi1> to vector<8x256xi1>
    %112 = vector.broadcast %cst_52 : f32 to vector<8x256xf32>
    %113 = arith.select %111, %109, %112 : vector<8x256xi1>, vector<8x256xf32>
    %c16_53 = arith.constant 16 : index
    %c0_54 = arith.constant 0 : index
    %114 = vector.load %arg6[%c16_53, %c0_54] : memref<72x256xf32, #tpu.memory_space<vmem>>, vector<8x256xf32>
    tpu.vector_store %arg6[%c16_53, %c0_54], %113 {strides = array<i32>} : memref<72x256xf32, #tpu.memory_space<vmem>>, vector<8x256xf32>,
    %cst_55 = arith.constant 0.000000e+00 : f32
    %115 = vector.broadcast %cst_55 : f32 to vector<8x1xf32>
    %116 = vector.extract_strided_slice %94 {offsets = [0, 0], sizes = [8, 255], strides = [1, 1]} : vector<8x256xf32> to vector<8x255xf32>
    %117 = tpu.concatenate %115, %116 in 1 : vector<8x1xf32>, vector<8x255xf32> -> vector<8x256xf32>
    %cst_56 = arith.constant 0.000000e+00 : f32
    %118 = vector.shape_cast %18 : vector<1x256xi1> to vector<1x256xi1>
    %119 = vector.broadcast %118 : vector<1x256xi1> to vector<8x256xi1>
    %120 = vector.broadcast %cst_56 : f32 to vector<8x256xf32>
    %121 = arith.select %119, %117, %120 : vector<8x256xi1>, vector<8x256xf32>
    %c24_57 = arith.constant 24 : index
    %c0_58 = arith.constant 0 : index
    %122 = vector.load %arg6[%c24_57, %c0_58] : memref<72x256xf32, #tpu.memory_space<vmem>>, vector<8x256xf32>
    tpu.vector_store %arg6[%c24_57, %c0_58], %121 {strides = array<i32>} : memref<72x256xf32, #tpu.memory_space<vmem>>, vector<8x256xf32>,
    %c32_59 = arith.constant 32 : index
    %c0_60 = arith.constant 0 : index
    %123 = vector.load %arg6[%c32_59, %c0_60] : memref<72x256xf32, #tpu.memory_space<vmem>>, vector<8x256xf32>
    tpu.vector_store %arg6[%c32_59, %c0_60], %94 {strides = array<i32>} : memref<72x256xf32, #tpu.memory_space<vmem>>, vector<8x256xf32>,
    %cst_61 = arith.constant 0.000000e+00 : f32
    %124 = vector.broadcast %cst_61 : f32 to vector<8x1xf32>
    %125 = vector.extract_strided_slice %94 {offsets = [0, 1], sizes = [8, 255], strides = [1, 1]} : vector<8x256xf32> to vector<8x255xf32>
    %126 = tpu.concatenate %125, %124 in 1 : vector<8x255xf32>, vector<8x1xf32> -> vector<8x256xf32>
    %cst_62 = arith.constant 0.000000e+00 : f32
    %127 = vector.shape_cast %20 : vector<1x256xi1> to vector<1x256xi1>
    %128 = vector.broadcast %127 : vector<1x256xi1> to vector<8x256xi1>
    %129 = vector.broadcast %cst_62 : f32 to vector<8x256xf32>
    %130 = arith.select %128, %126, %129 : vector<8x256xi1>, vector<8x256xf32>
    %c40_63 = arith.constant 40 : index
    %c0_64 = arith.constant 0 : index
    %131 = vector.load %arg6[%c40_63, %c0_64] : memref<72x256xf32, #tpu.memory_space<vmem>>, vector<8x256xf32>
    tpu.vector_store %arg6[%c40_63, %c0_64], %130 {strides = array<i32>} : memref<72x256xf32, #tpu.memory_space<vmem>>, vector<8x256xf32>,
    %cst_65 = arith.constant 0.000000e+00 : f32
    %132 = vector.broadcast %cst_65 : f32 to vector<8x15xf32>
    %133 = vector.extract_strided_slice %94 {offsets = [0, 15], sizes = [8, 241], strides = [1, 1]} : vector<8x256xf32> to vector<8x241xf32>
    %134 = tpu.concatenate %133, %132 in 1 : vector<8x241xf32>, vector<8x15xf32> -> vector<8x256xf32>
    %cst_66 = arith.constant 0.000000e+00 : f32
    %135 = vector.shape_cast %18 : vector<1x256xi1> to vector<1x256xi1>
    %136 = vector.broadcast %135 : vector<1x256xi1> to vector<8x256xi1>
    %137 = vector.broadcast %cst_66 : f32 to vector<8x256xf32>
    %138 = arith.select %136, %134, %137 : vector<8x256xi1>, vector<8x256xf32>
    %c48_67 = arith.constant 48 : index
    %c0_68 = arith.constant 0 : index
    %139 = vector.load %arg6[%c48_67, %c0_68] : memref<72x256xf32, #tpu.memory_space<vmem>>, vector<8x256xf32>
    tpu.vector_store %arg6[%c48_67, %c0_68], %138 {strides = array<i32>} : memref<72x256xf32, #tpu.memory_space<vmem>>, vector<8x256xf32>,
    %cst_69 = arith.constant 0.000000e+00 : f32
    %140 = vector.broadcast %cst_69 : f32 to vector<8x16xf32>
    %141 = vector.extract_strided_slice %94 {offsets = [0, 16], sizes = [8, 240], strides = [1, 1]} : vector<8x256xf32> to vector<8x240xf32>
    %142 = tpu.concatenate %141, %140 in 1 : vector<8x240xf32>, vector<8x16xf32> -> vector<8x256xf32>
    %c56_70 = arith.constant 56 : index
    %c0_71 = arith.constant 0 : index
    %143 = vector.load %arg6[%c56_70, %c0_71] : memref<72x256xf32, #tpu.memory_space<vmem>>, vector<8x256xf32>
    tpu.vector_store %arg6[%c56_70, %c0_71], %142 {strides = array<i32>} : memref<72x256xf32, #tpu.memory_space<vmem>>, vector<8x256xf32>,
    %cst_72 = arith.constant 0.000000e+00 : f32
    %144 = vector.broadcast %cst_72 : f32 to vector<8x17xf32>
    %145 = vector.extract_strided_slice %94 {offsets = [0, 17], sizes = [8, 239], strides = [1, 1]} : vector<8x256xf32> to vector<8x239xf32>
    %146 = tpu.concatenate %145, %144 in 1 : vector<8x239xf32>, vector<8x17xf32> -> vector<8x256xf32>
    %cst_73 = arith.constant 0.000000e+00 : f32
    %147 = vector.shape_cast %20 : vector<1x256xi1> to vector<1x256xi1>
    %148 = vector.broadcast %147 : vector<1x256xi1> to vector<8x256xi1>
    %149 = vector.broadcast %cst_73 : f32 to vector<8x256xf32>
    %150 = arith.select %148, %146, %149 : vector<8x256xi1>, vector<8x256xf32>
    %c64_74 = arith.constant 64 : index
    %c0_75 = arith.constant 0 : index
    %151 = vector.load %arg6[%c64_74, %c0_75] : memref<72x256xf32, #tpu.memory_space<vmem>>, vector<8x256xf32>
    tpu.vector_store %arg6[%c64_74, %c0_75], %150 {strides = array<i32>} : memref<72x256xf32, #tpu.memory_space<vmem>>, vector<8x256xf32>,
    %c1 = arith.constant 1 : index
    %c0_76 = arith.constant 0 : index
    %c0_77 = arith.constant 0 : index
    %152 = vector.load %arg2[%c1, %c0_76, %c0_77] : memref<4x8x72xbf16, #tpu.memory_space<vmem>>, vector<1x8x72xbf16>
    %153 = vector.shape_cast %152 : vector<1x8x72xbf16> to vector<8x72xbf16>
    %c0_78 = arith.constant 0 : index
    %c0_79 = arith.constant 0 : index
    %154 = vector.load %arg6[%c0_78, %c0_79] : memref<72x256xf32, #tpu.memory_space<vmem>>, vector<72x256xf32>
    %155 = arith.truncf %154 : vector<72x256xf32> to vector<72x256xbf16>
    %cst_80 = arith.constant dense<0.000000e+00> : vector<8x256xf32>
    %156 = tpu.matmul %153, %155, %cst_80 {dimension_numbers = #tpu.dot_dimension_numbers<[1], [0], [0], [1], [0, 0, 1, 1], [], []>} : vector<8x72xbf16>, vector<72x256xbf16>, vector<8x256xf32> -> vector<8x256xf32>
    %c0_81 = arith.constant 0 : index
    %c1_82 = arith.constant 1 : index
    %c0_83 = arith.constant 0 : index
    %c0_84 = arith.constant 0 : index
    %157 = vector.load %arg3[%c0_81, %c1_82, %c0_83, %c0_84] : memref<1x4x8x1xf32, #tpu.memory_space<vmem>>, vector<1x1x8x1xf32>
    %158 = vector.shape_cast %157 : vector<1x1x8x1xf32> to vector<8x1xf32>
    %159 = vector.broadcast %158 : vector<8x1xf32> to vector<8x256xf32>
    %160 = arith.mulf %156, %159 : vector<8x256xf32>
    %c0_85 = arith.constant 0 : index
    %c1_86 = arith.constant 1 : index
    %c0_87 = arith.constant 0 : index
    %c0_88 = arith.constant 0 : index
    %161 = vector.load %arg4[%c0_85, %c1_86, %c0_87, %c0_88] : memref<1x4x8x1xf32, #tpu.memory_space<vmem>>, vector<1x1x8x1xf32>
    %162 = vector.shape_cast %161 : vector<1x1x8x1xf32> to vector<8x1xf32>
    %163 = vector.broadcast %162 : vector<8x1xf32> to vector<8x256xf32>
    %164 = arith.addf %160, %163 : vector<8x256xf32>
    %165 = arith.addf %22, %164 : vector<8x256xf32>
    %cst_89 = arith.constant 0.000000e+00 : f32
    %166 = vector.broadcast %cst_89 : f32 to vector<8x256xf32>
    %167 = arith.maximumf %165, %166 : vector<8x256xf32>
    %cst_90 = arith.constant 0.000000e+00 : f32
    %168 = vector.broadcast %cst_90 : f32 to vector<8x17xf32>
    %169 = vector.extract_strided_slice %167 {offsets = [0, 0], sizes = [8, 239], strides = [1, 1]} : vector<8x256xf32> to vector<8x239xf32>
    %170 = tpu.concatenate %168, %169 in 1 : vector<8x17xf32>, vector<8x239xf32> -> vector<8x256xf32>
    %cst_91 = arith.constant 0.000000e+00 : f32
    %171 = vector.shape_cast %18 : vector<1x256xi1> to vector<1x256xi1>
    %172 = vector.broadcast %171 : vector<1x256xi1> to vector<8x256xi1>
    %173 = vector.broadcast %cst_91 : f32 to vector<8x256xf32>
    %174 = arith.select %172, %170, %173 : vector<8x256xi1>, vector<8x256xf32>
    %c0_92 = arith.constant 0 : index
    %c0_93 = arith.constant 0 : index
    %175 = vector.load %arg6[%c0_92, %c0_93] : memref<72x256xf32, #tpu.memory_space<vmem>>, vector<8x256xf32>
    tpu.vector_store %arg6[%c0_92, %c0_93], %174 {strides = array<i32>} : memref<72x256xf32, #tpu.memory_space<vmem>>, vector<8x256xf32>,
    %cst_94 = arith.constant 0.000000e+00 : f32
    %176 = vector.broadcast %cst_94 : f32 to vector<8x16xf32>
    %177 = vector.extract_strided_slice %167 {offsets = [0, 0], sizes = [8, 240], strides = [1, 1]} : vector<8x256xf32> to vector<8x240xf32>
    %178 = tpu.concatenate %176, %177 in 1 : vector<8x16xf32>, vector<8x240xf32> -> vector<8x256xf32>
    %c8_95 = arith.constant 8 : index
    %c0_96 = arith.constant 0 : index
    %179 = vector.load %arg6[%c8_95, %c0_96] : memref<72x256xf32, #tpu.memory_space<vmem>>, vector<8x256xf32>
    tpu.vector_store %arg6[%c8_95, %c0_96], %178 {strides = array<i32>} : memref<72x256xf32, #tpu.memory_space<vmem>>, vector<8x256xf32>,
    %cst_97 = arith.constant 0.000000e+00 : f32
    %180 = vector.broadcast %cst_97 : f32 to vector<8x15xf32>
    %181 = vector.extract_strided_slice %167 {offsets = [0, 0], sizes = [8, 241], strides = [1, 1]} : vector<8x256xf32> to vector<8x241xf32>
    %182 = tpu.concatenate %180, %181 in 1 : vector<8x15xf32>, vector<8x241xf32> -> vector<8x256xf32>
    %cst_98 = arith.constant 0.000000e+00 : f32
    %183 = vector.shape_cast %20 : vector<1x256xi1> to vector<1x256xi1>
    %184 = vector.broadcast %183 : vector<1x256xi1> to vector<8x256xi1>
    %185 = vector.broadcast %cst_98 : f32 to vector<8x256xf32>
    %186 = arith.select %184, %182, %185 : vector<8x256xi1>, vector<8x256xf32>
    %c16_99 = arith.constant 16 : index
    %c0_100 = arith.constant 0 : index
    %187 = vector.load %arg6[%c16_99, %c0_100] : memref<72x256xf32, #tpu.memory_space<vmem>>, vector<8x256xf32>
    tpu.vector_store %arg6[%c16_99, %c0_100], %186 {strides = array<i32>} : memref<72x256xf32, #tpu.memory_space<vmem>>, vector<8x256xf32>,
    %cst_101 = arith.constant 0.000000e+00 : f32
    %188 = vector.broadcast %cst_101 : f32 to vector<8x1xf32>
    %189 = vector.extract_strided_slice %167 {offsets = [0, 0], sizes = [8, 255], strides = [1, 1]} : vector<8x256xf32> to vector<8x255xf32>
    %190 = tpu.concatenate %188, %189 in 1 : vector<8x1xf32>, vector<8x255xf32> -> vector<8x256xf32>
    %cst_102 = arith.constant 0.000000e+00 : f32
    %191 = vector.shape_cast %18 : vector<1x256xi1> to vector<1x256xi1>
    %192 = vector.broadcast %191 : vector<1x256xi1> to vector<8x256xi1>
    %193 = vector.broadcast %cst_102 : f32 to vector<8x256xf32>
    %194 = arith.select %192, %190, %193 : vector<8x256xi1>, vector<8x256xf32>
    %c24_103 = arith.constant 24 : index
    %c0_104 = arith.constant 0 : index
    %195 = vector.load %arg6[%c24_103, %c0_104] : memref<72x256xf32, #tpu.memory_space<vmem>>, vector<8x256xf32>
    tpu.vector_store %arg6[%c24_103, %c0_104], %194 {strides = array<i32>} : memref<72x256xf32, #tpu.memory_space<vmem>>, vector<8x256xf32>,
    %c32_105 = arith.constant 32 : index
    %c0_106 = arith.constant 0 : index
    %196 = vector.load %arg6[%c32_105, %c0_106] : memref<72x256xf32, #tpu.memory_space<vmem>>, vector<8x256xf32>
    tpu.vector_store %arg6[%c32_105, %c0_106], %167 {strides = array<i32>} : memref<72x256xf32, #tpu.memory_space<vmem>>, vector<8x256xf32>,
    %cst_107 = arith.constant 0.000000e+00 : f32
    %197 = vector.broadcast %cst_107 : f32 to vector<8x1xf32>
    %198 = vector.extract_strided_slice %167 {offsets = [0, 1], sizes = [8, 255], strides = [1, 1]} : vector<8x256xf32> to vector<8x255xf32>
    %199 = tpu.concatenate %198, %197 in 1 : vector<8x255xf32>, vector<8x1xf32> -> vector<8x256xf32>
    %cst_108 = arith.constant 0.000000e+00 : f32
    %200 = vector.shape_cast %20 : vector<1x256xi1> to vector<1x256xi1>
    %201 = vector.broadcast %200 : vector<1x256xi1> to vector<8x256xi1>
    %202 = vector.broadcast %cst_108 : f32 to vector<8x256xf32>
    %203 = arith.select %201, %199, %202 : vector<8x256xi1>, vector<8x256xf32>
    %c40_109 = arith.constant 40 : index
    %c0_110 = arith.constant 0 : index
    %204 = vector.load %arg6[%c40_109, %c0_110] : memref<72x256xf32, #tpu.memory_space<vmem>>, vector<8x256xf32>
    tpu.vector_store %arg6[%c40_109, %c0_110], %203 {strides = array<i32>} : memref<72x256xf32, #tpu.memory_space<vmem>>, vector<8x256xf32>,
    %cst_111 = arith.constant 0.000000e+00 : f32
    %205 = vector.broadcast %cst_111 : f32 to vector<8x15xf32>
    %206 = vector.extract_strided_slice %167 {offsets = [0, 15], sizes = [8, 241], strides = [1, 1]} : vector<8x256xf32> to vector<8x241xf32>
    %207 = tpu.concatenate %206, %205 in 1 : vector<8x241xf32>, vector<8x15xf32> -> vector<8x256xf32>
    %cst_112 = arith.constant 0.000000e+00 : f32
    %208 = vector.shape_cast %18 : vector<1x256xi1> to vector<1x256xi1>
    %209 = vector.broadcast %208 : vector<1x256xi1> to vector<8x256xi1>
    %210 = vector.broadcast %cst_112 : f32 to vector<8x256xf32>
    %211 = arith.select %209, %207, %210 : vector<8x256xi1>, vector<8x256xf32>
    %c48_113 = arith.constant 48 : index
    %c0_114 = arith.constant 0 : index
    %212 = vector.load %arg6[%c48_113, %c0_114] : memref<72x256xf32, #tpu.memory_space<vmem>>, vector<8x256xf32>
    tpu.vector_store %arg6[%c48_113, %c0_114], %211 {strides = array<i32>} : memref<72x256xf32, #tpu.memory_space<vmem>>, vector<8x256xf32>,
    %cst_115 = arith.constant 0.000000e+00 : f32
    %213 = vector.broadcast %cst_115 : f32 to vector<8x16xf32>
    %214 = vector.extract_strided_slice %167 {offsets = [0, 16], sizes = [8, 240], strides = [1, 1]} : vector<8x256xf32> to vector<8x240xf32>
    %215 = tpu.concatenate %214, %213 in 1 : vector<8x240xf32>, vector<8x16xf32> -> vector<8x256xf32>
    %c56_116 = arith.constant 56 : index
    %c0_117 = arith.constant 0 : index
    %216 = vector.load %arg6[%c56_116, %c0_117] : memref<72x256xf32, #tpu.memory_space<vmem>>, vector<8x256xf32>
    tpu.vector_store %arg6[%c56_116, %c0_117], %215 {strides = array<i32>} : memref<72x256xf32, #tpu.memory_space<vmem>>, vector<8x256xf32>,
    %cst_118 = arith.constant 0.000000e+00 : f32
    %217 = vector.broadcast %cst_118 : f32 to vector<8x17xf32>
    %218 = vector.extract_strided_slice %167 {offsets = [0, 17], sizes = [8, 239], strides = [1, 1]} : vector<8x256xf32> to vector<8x239xf32>
    %219 = tpu.concatenate %218, %217 in 1 : vector<8x239xf32>, vector<8x17xf32> -> vector<8x256xf32>
    %cst_119 = arith.constant 0.000000e+00 : f32
    %220 = vector.shape_cast %20 : vector<1x256xi1> to vector<1x256xi1>
    %221 = vector.broadcast %220 : vector<1x256xi1> to vector<8x256xi1>
    %222 = vector.broadcast %cst_119 : f32 to vector<8x256xf32>
    %223 = arith.select %221, %219, %222 : vector<8x256xi1>, vector<8x256xf32>
    %c64_120 = arith.constant 64 : index
    %c0_121 = arith.constant 0 : index
    %224 = vector.load %arg6[%c64_120, %c0_121] : memref<72x256xf32, #tpu.memory_space<vmem>>, vector<8x256xf32>
    tpu.vector_store %arg6[%c64_120, %c0_121], %223 {strides = array<i32>} : memref<72x256xf32, #tpu.memory_space<vmem>>, vector<8x256xf32>,
    %c2 = arith.constant 2 : index
    %c0_122 = arith.constant 0 : index
    %c0_123 = arith.constant 0 : index
    %225 = vector.load %arg2[%c2, %c0_122, %c0_123] : memref<4x8x72xbf16, #tpu.memory_space<vmem>>, vector<1x8x72xbf16>
    %226 = vector.shape_cast %225 : vector<1x8x72xbf16> to vector<8x72xbf16>
    %c0_124 = arith.constant 0 : index
    %c0_125 = arith.constant 0 : index
    %227 = vector.load %arg6[%c0_124, %c0_125] : memref<72x256xf32, #tpu.memory_space<vmem>>, vector<72x256xf32>
    %228 = arith.truncf %227 : vector<72x256xf32> to vector<72x256xbf16>
    %cst_126 = arith.constant dense<0.000000e+00> : vector<8x256xf32>
    %229 = tpu.matmul %226, %228, %cst_126 {dimension_numbers = #tpu.dot_dimension_numbers<[1], [0], [0], [1], [0, 0, 1, 1], [], []>} : vector<8x72xbf16>, vector<72x256xbf16>, vector<8x256xf32> -> vector<8x256xf32>
    %c0_127 = arith.constant 0 : index
    %c2_128 = arith.constant 2 : index
    %c0_129 = arith.constant 0 : index
    %c0_130 = arith.constant 0 : index
    %230 = vector.load %arg3[%c0_127, %c2_128, %c0_129, %c0_130] : memref<1x4x8x1xf32, #tpu.memory_space<vmem>>, vector<1x1x8x1xf32>
    %231 = vector.shape_cast %230 : vector<1x1x8x1xf32> to vector<8x1xf32>
    %232 = vector.broadcast %231 : vector<8x1xf32> to vector<8x256xf32>
    %233 = arith.mulf %229, %232 : vector<8x256xf32>
    %c0_131 = arith.constant 0 : index
    %c2_132 = arith.constant 2 : index
    %c0_133 = arith.constant 0 : index
    %c0_134 = arith.constant 0 : index
    %234 = vector.load %arg4[%c0_131, %c2_132, %c0_133, %c0_134] : memref<1x4x8x1xf32, #tpu.memory_space<vmem>>, vector<1x1x8x1xf32>
    %235 = vector.shape_cast %234 : vector<1x1x8x1xf32> to vector<8x1xf32>
    %236 = vector.broadcast %235 : vector<8x1xf32> to vector<8x256xf32>
    %237 = arith.addf %233, %236 : vector<8x256xf32>
    %cst_135 = arith.constant 0.000000e+00 : f32
    %238 = vector.broadcast %cst_135 : f32 to vector<8x256xf32>
    %239 = arith.maximumf %237, %238 : vector<8x256xf32>
    %cst_136 = arith.constant 0.000000e+00 : f32
    %240 = vector.broadcast %cst_136 : f32 to vector<8x17xf32>
    %241 = vector.extract_strided_slice %239 {offsets = [0, 0], sizes = [8, 239], strides = [1, 1]} : vector<8x256xf32> to vector<8x239xf32>
    %242 = tpu.concatenate %240, %241 in 1 : vector<8x17xf32>, vector<8x239xf32> -> vector<8x256xf32>
    %cst_137 = arith.constant 0.000000e+00 : f32
    %243 = vector.shape_cast %18 : vector<1x256xi1> to vector<1x256xi1>
    %244 = vector.broadcast %243 : vector<1x256xi1> to vector<8x256xi1>
    %245 = vector.broadcast %cst_137 : f32 to vector<8x256xf32>
    %246 = arith.select %244, %242, %245 : vector<8x256xi1>, vector<8x256xf32>
    %c0_138 = arith.constant 0 : index
    %c0_139 = arith.constant 0 : index
    %247 = vector.load %arg6[%c0_138, %c0_139] : memref<72x256xf32, #tpu.memory_space<vmem>>, vector<8x256xf32>
    tpu.vector_store %arg6[%c0_138, %c0_139], %246 {strides = array<i32>} : memref<72x256xf32, #tpu.memory_space<vmem>>, vector<8x256xf32>,
    %cst_140 = arith.constant 0.000000e+00 : f32
    %248 = vector.broadcast %cst_140 : f32 to vector<8x16xf32>
    %249 = vector.extract_strided_slice %239 {offsets = [0, 0], sizes = [8, 240], strides = [1, 1]} : vector<8x256xf32> to vector<8x240xf32>
    %250 = tpu.concatenate %248, %249 in 1 : vector<8x16xf32>, vector<8x240xf32> -> vector<8x256xf32>
    %c8_141 = arith.constant 8 : index
    %c0_142 = arith.constant 0 : index
    %251 = vector.load %arg6[%c8_141, %c0_142] : memref<72x256xf32, #tpu.memory_space<vmem>>, vector<8x256xf32>
    tpu.vector_store %arg6[%c8_141, %c0_142], %250 {strides = array<i32>} : memref<72x256xf32, #tpu.memory_space<vmem>>, vector<8x256xf32>,
    %cst_143 = arith.constant 0.000000e+00 : f32
    %252 = vector.broadcast %cst_143 : f32 to vector<8x15xf32>
    %253 = vector.extract_strided_slice %239 {offsets = [0, 0], sizes = [8, 241], strides = [1, 1]} : vector<8x256xf32> to vector<8x241xf32>
    %254 = tpu.concatenate %252, %253 in 1 : vector<8x15xf32>, vector<8x241xf32> -> vector<8x256xf32>
    %cst_144 = arith.constant 0.000000e+00 : f32
    %255 = vector.shape_cast %20 : vector<1x256xi1> to vector<1x256xi1>
    %256 = vector.broadcast %255 : vector<1x256xi1> to vector<8x256xi1>
    %257 = vector.broadcast %cst_144 : f32 to vector<8x256xf32>
    %258 = arith.select %256, %254, %257 : vector<8x256xi1>, vector<8x256xf32>
    %c16_145 = arith.constant 16 : index
    %c0_146 = arith.constant 0 : index
    %259 = vector.load %arg6[%c16_145, %c0_146] : memref<72x256xf32, #tpu.memory_space<vmem>>, vector<8x256xf32>
    tpu.vector_store %arg6[%c16_145, %c0_146], %258 {strides = array<i32>} : memref<72x256xf32, #tpu.memory_space<vmem>>, vector<8x256xf32>,
    %cst_147 = arith.constant 0.000000e+00 : f32
    %260 = vector.broadcast %cst_147 : f32 to vector<8x1xf32>
    %261 = vector.extract_strided_slice %239 {offsets = [0, 0], sizes = [8, 255], strides = [1, 1]} : vector<8x256xf32> to vector<8x255xf32>
    %262 = tpu.concatenate %260, %261 in 1 : vector<8x1xf32>, vector<8x255xf32> -> vector<8x256xf32>
    %cst_148 = arith.constant 0.000000e+00 : f32
    %263 = vector.shape_cast %18 : vector<1x256xi1> to vector<1x256xi1>
    %264 = vector.broadcast %263 : vector<1x256xi1> to vector<8x256xi1>
    %265 = vector.broadcast %cst_148 : f32 to vector<8x256xf32>
    %266 = arith.select %264, %262, %265 : vector<8x256xi1>, vector<8x256xf32>
    %c24_149 = arith.constant 24 : index
    %c0_150 = arith.constant 0 : index
    %267 = vector.load %arg6[%c24_149, %c0_150] : memref<72x256xf32, #tpu.memory_space<vmem>>, vector<8x256xf32>
    tpu.vector_store %arg6[%c24_149, %c0_150], %266 {strides = array<i32>} : memref<72x256xf32, #tpu.memory_space<vmem>>, vector<8x256xf32>,
    %c32_151 = arith.constant 32 : index
    %c0_152 = arith.constant 0 : index
    %268 = vector.load %arg6[%c32_151, %c0_152] : memref<72x256xf32, #tpu.memory_space<vmem>>, vector<8x256xf32>
    tpu.vector_store %arg6[%c32_151, %c0_152], %239 {strides = array<i32>} : memref<72x256xf32, #tpu.memory_space<vmem>>, vector<8x256xf32>,
    %cst_153 = arith.constant 0.000000e+00 : f32
    %269 = vector.broadcast %cst_153 : f32 to vector<8x1xf32>
    %270 = vector.extract_strided_slice %239 {offsets = [0, 1], sizes = [8, 255], strides = [1, 1]} : vector<8x256xf32> to vector<8x255xf32>
    %271 = tpu.concatenate %270, %269 in 1 : vector<8x255xf32>, vector<8x1xf32> -> vector<8x256xf32>
    %cst_154 = arith.constant 0.000000e+00 : f32
    %272 = vector.shape_cast %20 : vector<1x256xi1> to vector<1x256xi1>
    %273 = vector.broadcast %272 : vector<1x256xi1> to vector<8x256xi1>
    %274 = vector.broadcast %cst_154 : f32 to vector<8x256xf32>
    %275 = arith.select %273, %271, %274 : vector<8x256xi1>, vector<8x256xf32>
    %c40_155 = arith.constant 40 : index
    %c0_156 = arith.constant 0 : index
    %276 = vector.load %arg6[%c40_155, %c0_156] : memref<72x256xf32, #tpu.memory_space<vmem>>, vector<8x256xf32>
    tpu.vector_store %arg6[%c40_155, %c0_156], %275 {strides = array<i32>} : memref<72x256xf32, #tpu.memory_space<vmem>>, vector<8x256xf32>,
    %cst_157 = arith.constant 0.000000e+00 : f32
    %277 = vector.broadcast %cst_157 : f32 to vector<8x15xf32>
    %278 = vector.extract_strided_slice %239 {offsets = [0, 15], sizes = [8, 241], strides = [1, 1]} : vector<8x256xf32> to vector<8x241xf32>
    %279 = tpu.concatenate %278, %277 in 1 : vector<8x241xf32>, vector<8x15xf32> -> vector<8x256xf32>
    %cst_158 = arith.constant 0.000000e+00 : f32
    %280 = vector.shape_cast %18 : vector<1x256xi1> to vector<1x256xi1>
    %281 = vector.broadcast %280 : vector<1x256xi1> to vector<8x256xi1>
    %282 = vector.broadcast %cst_158 : f32 to vector<8x256xf32>
    %283 = arith.select %281, %279, %282 : vector<8x256xi1>, vector<8x256xf32>
    %c48_159 = arith.constant 48 : index
    %c0_160 = arith.constant 0 : index
    %284 = vector.load %arg6[%c48_159, %c0_160] : memref<72x256xf32, #tpu.memory_space<vmem>>, vector<8x256xf32>
    tpu.vector_store %arg6[%c48_159, %c0_160], %283 {strides = array<i32>} : memref<72x256xf32, #tpu.memory_space<vmem>>, vector<8x256xf32>,
    %cst_161 = arith.constant 0.000000e+00 : f32
    %285 = vector.broadcast %cst_161 : f32 to vector<8x16xf32>
    %286 = vector.extract_strided_slice %239 {offsets = [0, 16], sizes = [8, 240], strides = [1, 1]} : vector<8x256xf32> to vector<8x240xf32>
    %287 = tpu.concatenate %286, %285 in 1 : vector<8x240xf32>, vector<8x16xf32> -> vector<8x256xf32>
    %c56_162 = arith.constant 56 : index
    %c0_163 = arith.constant 0 : index
    %288 = vector.load %arg6[%c56_162, %c0_163] : memref<72x256xf32, #tpu.memory_space<vmem>>, vector<8x256xf32>
    tpu.vector_store %arg6[%c56_162, %c0_163], %287 {strides = array<i32>} : memref<72x256xf32, #tpu.memory_space<vmem>>, vector<8x256xf32>,
    %cst_164 = arith.constant 0.000000e+00 : f32
    %289 = vector.broadcast %cst_164 : f32 to vector<8x17xf32>
    %290 = vector.extract_strided_slice %239 {offsets = [0, 17], sizes = [8, 239], strides = [1, 1]} : vector<8x256xf32> to vector<8x239xf32>
    %291 = tpu.concatenate %290, %289 in 1 : vector<8x239xf32>, vector<8x17xf32> -> vector<8x256xf32>
    %cst_165 = arith.constant 0.000000e+00 : f32
    %292 = vector.shape_cast %20 : vector<1x256xi1> to vector<1x256xi1>
    %293 = vector.broadcast %292 : vector<1x256xi1> to vector<8x256xi1>
    %294 = vector.broadcast %cst_165 : f32 to vector<8x256xf32>
    %295 = arith.select %293, %291, %294 : vector<8x256xi1>, vector<8x256xf32>
    %c64_166 = arith.constant 64 : index
    %c0_167 = arith.constant 0 : index
    %296 = vector.load %arg6[%c64_166, %c0_167] : memref<72x256xf32, #tpu.memory_space<vmem>>, vector<8x256xf32>
    tpu.vector_store %arg6[%c64_166, %c0_167], %295 {strides = array<i32>} : memref<72x256xf32, #tpu.memory_space<vmem>>, vector<8x256xf32>,
    %c3 = arith.constant 3 : index
    %c0_168 = arith.constant 0 : index
    %c0_169 = arith.constant 0 : index
    %297 = vector.load %arg2[%c3, %c0_168, %c0_169] : memref<4x8x72xbf16, #tpu.memory_space<vmem>>, vector<1x8x72xbf16>
    %298 = vector.shape_cast %297 : vector<1x8x72xbf16> to vector<8x72xbf16>
    %c0_170 = arith.constant 0 : index
    %c0_171 = arith.constant 0 : index
    %299 = vector.load %arg6[%c0_170, %c0_171] : memref<72x256xf32, #tpu.memory_space<vmem>>, vector<72x256xf32>
    %300 = arith.truncf %299 : vector<72x256xf32> to vector<72x256xbf16>
    %cst_172 = arith.constant dense<0.000000e+00> : vector<8x256xf32>
    %301 = tpu.matmul %298, %300, %cst_172 {dimension_numbers = #tpu.dot_dimension_numbers<[1], [0], [0], [1], [0, 0, 1, 1], [], []>} : vector<8x72xbf16>, vector<72x256xbf16>, vector<8x256xf32> -> vector<8x256xf32>
    %c0_173 = arith.constant 0 : index
    %c3_174 = arith.constant 3 : index
    %c0_175 = arith.constant 0 : index
    %c0_176 = arith.constant 0 : index
    %302 = vector.load %arg3[%c0_173, %c3_174, %c0_175, %c0_176] : memref<1x4x8x1xf32, #tpu.memory_space<vmem>>, vector<1x1x8x1xf32>
    %303 = vector.shape_cast %302 : vector<1x1x8x1xf32> to vector<8x1xf32>
    %304 = vector.broadcast %303 : vector<8x1xf32> to vector<8x256xf32>
    %305 = arith.mulf %301, %304 : vector<8x256xf32>
    %c0_177 = arith.constant 0 : index
    %c3_178 = arith.constant 3 : index
    %c0_179 = arith.constant 0 : index
    %c0_180 = arith.constant 0 : index
    %306 = vector.load %arg4[%c0_177, %c3_178, %c0_179, %c0_180] : memref<1x4x8x1xf32, #tpu.memory_space<vmem>>, vector<1x1x8x1xf32>
    %307 = vector.shape_cast %306 : vector<1x1x8x1xf32> to vector<8x1xf32>
    %308 = vector.broadcast %307 : vector<8x1xf32> to vector<8x256xf32>
    %309 = arith.addf %305, %308 : vector<8x256xf32>
    %310 = arith.addf %167, %309 : vector<8x256xf32>
    %cst_181 = arith.constant 0.000000e+00 : f32
    %311 = vector.broadcast %cst_181 : f32 to vector<8x256xf32>
    %312 = arith.maximumf %310, %311 : vector<8x256xf32>
    %c0_182 = arith.constant 0 : index
    %c0_183 = arith.constant 0 : index
    %c0_184 = arith.constant 0 : index
    %313 = vector.load %arg5[%c0_182, %c0_183, %c0_184] : memref<1x8x256xf32, #tpu.memory_space<vmem>>, vector<1x8x256xf32>
    %314 = vector.shape_cast %313 : vector<1x8x256xf32> to vector<8x256xf32>
    %315 = vector.shape_cast %312 : vector<8x256xf32> to vector<1x8x256xf32>
    tpu.vector_store %arg5[%c0_182, %c0_183, %c0_184], %315 {strides = array<i32>} : memref<1x8x256xf32, #tpu.memory_space<vmem>>, vector<1x8x256xf32>,
    return
  }
  func.func @transform_0(%arg0: i32) -> (i32, i32, i32) {
    %c0_i32 = arith.constant 0 : i32
    %c0_i32_0 = arith.constant 0 : i32
    %c0_i32_1 = arith.constant 0 : i32
    return %arg0, %c0_i32, %c0_i32_0 : i32, i32, i32
  }
  func.func @transform_1(%arg0: i32) -> (i32, i32, i32) {
    %c0_i32 = arith.constant 0 : i32
    %c0_i32_0 = arith.constant 0 : i32
    %c0_i32_1 = arith.constant 0 : i32
    %c0_i32_2 = arith.constant 0 : i32
    return %c0_i32, %c0_i32_0, %c0_i32_1 : i32, i32, i32
  }
  func.func @transform_2(%arg0: i32) -> (i32, i32, i32, i32) {
    %c0_i32 = arith.constant 0 : i32
    %c0_i32_0 = arith.constant 0 : i32
    %c0_i32_1 = arith.constant 0 : i32
    %c0_i32_2 = arith.constant 0 : i32
    return %arg0, %c0_i32, %c0_i32_0, %c0_i32_1 : i32, i32, i32, i32
  }
  func.func @transform_3(%arg0: i32) -> (i32, i32, i32, i32) {
    %c0_i32 = arith.constant 0 : i32
    %c0_i32_0 = arith.constant 0 : i32
    %c0_i32_1 = arith.constant 0 : i32
    %c0_i32_2 = arith.constant 0 : i32
    return %arg0, %c0_i32, %c0_i32_0, %c0_i32_1 : i32, i32, i32, i32
  }
  func.func @transform_4(%arg0: i32) -> (i32, i32, i32) {
    %c0_i32 = arith.constant 0 : i32
    %c0_i32_0 = arith.constant 0 : i32
    %c0_i32_1 = arith.constant 0 : i32
    return %arg0, %c0_i32, %c0_i32_0 : i32, i32, i32
  }
}

</mosaic_0001>

<llo_original>
// kernel: bnet_forward.1
$region0: #{bnet_forward.1}
  #allocation0 [shape = 'u32[]', space=smem, size = 0x4, offset = 0x4, fixed_abs, tag = 'smem constant byte address 0x4 - core index']
  #allocation1 [shape = 'u32[144,128]{1,0:T(1,128)}', space=vmem, size = 0x12000, scoped, tag = 'internal scratch']
  #allocation2 [shape = 'f32[72,256]{1,0:T(8,128)}', space=vmem, size = 0x12000, scoped, tag = 'scratch operand']
  %s0 = inlined_call_operand.vmem [shape: f32[2,8,256], index: 0, kind: input, shape index: {}]
  %s1 = inlined_call_operand.vmem [shape: bf16[4,8,72], index: 1, kind: input, shape index: {}]
  %s2 = inlined_call_operand.vmem [shape: f32[2,4,8,1], index: 2, kind: input, shape index: {}]
  %s3 = inlined_call_operand.vmem [shape: f32[2,4,8,1], index: 3, kind: input, shape index: {}]
  %s4 = inlined_call_operand.vmem [shape: f32[2,8,256], index: 4, kind: output, shape index: {}]
  %s5 = sld [smem:[#allocation0]]
  $region49: #{bnet_forward.1} parent=0
    _
  %s7 = ssub.s32 1, %s5
  %s8 = scalar_select 0, %s7, %s5
  loop: start=0, step=1, limit=4
  $region2: #{bnet_forward.1} parent=0 // loop_pre_header
    _
  $region3: #{bnet_forward.1} parent=0 // loop_header
    %s10 = sphi 0, %s14
    %p11 = scmp.ge.s32.totalorder %s10, 4
    %s20 = sphi 0, %s22
    %s23 = sphi 0, %s20
    %s24 = sphi 0, %s23
    %s40 = sphi 0, %s24
    %s44 = sphi 0, %s44
    %s46 = sphi 0, %s44
    %s47 = sphi 0, %s46
    %s61 = sphi 0, %s47
    %s67 = sphi 0, %s69
    %s70 = sphi 0, %s67
    %s71 = sphi 0, %s70
    %s87 = sphi 0, %s71
    %s93 = sphi 0, %s95
    %s96 = sphi 0, %s93
    %s97 = sphi 0, %s96
    %s113 = sphi 0, %s97
    %s119 = sphi 0, %s121
    %s122 = sphi 0, %s119
    %s123 = sphi 0, %s122
    %s139 = sphi 0, %s123
  $region4: #{bnet_forward.1} parent=0 // loop_header_branch
    %13 = sbr.rel (%p11) target = $region8
  $region5: #{bnet_forward.1} parent=0 // loop_body
    %s15 = ssub.s32 %s10, 1
    %s16 = ssub.s32 %s10, 2
    %s17 = sadd.s32 %s10, 1
    %s18 = ssub.s32 %s10, %s17
    %p19 = scmp.eq.s32.totalorder %s18, 0
    %s21 = sadd.s32 %s20, 1
    %s22 = scalar_select %p19, %s20, %s21
    %p25 = pneg %p19
    %p26 = scmp.eq.s32.totalorder %s10, 1
    %p27 = por %p25, %p26
    %p28 = scmp.ne.s32.totalorder %s20, %s23
    %p29 = scmp.eq.s32.totalorder %s10, 0
    %p30 = por %p28, %p29
    %p31 = scmp.ne.s32.totalorder %s20, %s23
    %p32 = scmp.eq.s32.totalorder %s15, 1
    %p33 = por %p31, %p32
    %p34 = scmp.ne.s32.totalorder %s23, %s24
    %p35 = scmp.eq.s32.totalorder %s15, 0
    %p36 = por %p34, %p35
    %p37 = scmp.ne.s32.totalorder %s23, %s24
    %p38 = scmp.eq.s32.totalorder %s16, 1
    %p39 = por %p37, %p38
    %p41 = scmp.ne.s32.totalorder %s24, %s40
    %p42 = scmp.eq.s32.totalorder %s16, 0
    %p43 = por %p41, %p42
    %s45 = sadd.s32 %s44, 1
    %p48 = scmp.eq.s32.totalorder %s10, 1
    %p49 = scmp.ne.s32.totalorder %s44, %s46
    %p50 = scmp.eq.s32.totalorder %s10, 0
    %p51 = por %p49, %p50
    %p52 = scmp.ne.s32.totalorder %s44, %s46
    %p53 = scmp.eq.s32.totalorder %s15, 1
    %p54 = por %p52, %p53
    %p55 = scmp.ne.s32.totalorder %s46, %s47
    %p56 = scmp.eq.s32.totalorder %s15, 0
    %p57 = por %p55, %p56
    %p58 = scmp.ne.s32.totalorder %s46, %s47
    %p59 = scmp.eq.s32.totalorder %s16, 1
    %p60 = por %p58, %p59
    %p62 = scmp.ne.s32.totalorder %s47, %s61
    %p63 = scmp.eq.s32.totalorder %s16, 0
    %p64 = por %p62, %p63
    %s65 = ssub.s32 %s10, %s17
    %p66 = scmp.eq.s32.totalorder %s65, 0
    %s68 = sadd.s32 %s67, 1
    %s69 = scalar_select %p66, %s67, %s68
    %p72 = pneg %p66
    %p73 = scmp.eq.s32.totalorder %s10, 1
    %p74 = por %p72, %p73
    %p75 = scmp.ne.s32.totalorder %s67, %s70
    %p76 = scmp.eq.s32.totalorder %s10, 0
    %p77 = por %p75, %p76
    %p78 = scmp.ne.s32.totalorder %s67, %s70
    %p79 = scmp.eq.s32.totalorder %s15, 1
    %p80 = por %p78, %p79
    %p81 = scmp.ne.s32.totalorder %s70, %s71
    %p82 = scmp.eq.s32.totalorder %s15, 0
    %p83 = por %p81, %p82
    %p84 = scmp.ne.s32.totalorder %s70, %s71
    %p85 = scmp.eq.s32.totalorder %s16, 1
    %p86 = por %p84, %p85
    %p88 = scmp.ne.s32.totalorder %s71, %s87
    %p89 = scmp.eq.s32.totalorder %s16, 0
    %p90 = por %p88, %p89
    %s91 = ssub.s32 %s10, %s17
    %p92 = scmp.eq.s32.totalorder %s91, 0
    %s94 = sadd.s32 %s93, 1
    %s95 = scalar_select %p92, %s93, %s94
    %p98 = pneg %p92
    %p99 = scmp.eq.s32.totalorder %s10, 1
    %p100 = por %p98, %p99
    %p101 = scmp.ne.s32.totalorder %s93, %s96
    %p102 = scmp.eq.s32.totalorder %s10, 0
    %p103 = por %p101, %p102
    %p104 = scmp.ne.s32.totalorder %s93, %s96
    %p105 = scmp.eq.s32.totalorder %s15, 1
    %p106 = por %p104, %p105
    %p107 = scmp.ne.s32.totalorder %s96, %s97
    %p108 = scmp.eq.s32.totalorder %s15, 0
    %p109 = por %p107, %p108
    %p110 = scmp.ne.s32.totalorder %s96, %s97
    %p111 = scmp.eq.s32.totalorder %s16, 1
    %p112 = por %p110, %p111
    %p114 = scmp.ne.s32.totalorder %s97, %s113
    %p115 = scmp.eq.s32.totalorder %s16, 0
    %p116 = por %p114, %p115
    %s117 = ssub.s32 %s10, %s17
    %p118 = scmp.eq.s32.totalorder %s117, 0
    %s120 = sadd.s32 %s119, 1
    %s121 = scalar_select %p118, %s119, %s120
    %p124 = pneg %p118
    %p125 = scmp.eq.s32.totalorder %s10, 1
    %p126 = por %p124, %p125
    %p127 = scmp.ne.s32.totalorder %s119, %s122
    %p128 = scmp.eq.s32.totalorder %s10, 0
    %p129 = por %p127, %p128
    %p130 = scmp.ne.s32.totalorder %s119, %s122
    %p131 = scmp.eq.s32.totalorder %s15, 1
    %p132 = por %p130, %p131
    %p133 = scmp.ne.s32.totalorder %s122, %s123
    %p134 = scmp.eq.s32.totalorder %s15, 0
    %p135 = por %p133, %p134
    %p136 = scmp.ne.s32.totalorder %s122, %s123
    %p137 = scmp.eq.s32.totalorder %s16, 1
    %p138 = por %p136, %p137
    %p140 = scmp.ne.s32.totalorder %s123, %s139
    %p141 = scmp.eq.s32.totalorder %s16, 0
    %p142 = por %p140, %p141
    %p143 = scmp.le.s32.totalorder 1, %s10
    %p144 = scmp.lt.s32.totalorder %s10, 3
    %p145 = pnand %p143, %p144
    %p146 = pneg %p145
    // Predicated region
    $region9: #{bnet_forward.1} parent=5 // pred_check
      _
    $region10: #{bnet_forward.1} parent=5 // pred_check_branch
      %148 = sbr.rel (%p145) target = $region12
    $region11: #{bnet_forward.1} parent=5 // pred_region
      %s149 = ssub.s32 %s10, 1
      // Predicated region
      $region13: #{bnet_forward.1} parent=11 // pred_check
        %p150 = pneg %p57
      $region14: #{bnet_forward.1} parent=11 // pred_check_branch
        %152 = sbr.rel (%p150) target = $region16
      $region15: #{bnet_forward.1} parent=11 // pred_region
        _
      $region16: #{bnet_forward.1} parent=11 // pred_fallthru
        _
    $region12: #{bnet_forward.1} parent=5 // pred_fallthru
      _
    %p153 = scmp.lt.s32.totalorder %s10, 2
    // Predicated region
    $region17: #{bnet_forward.1} parent=5 // pred_check
      %p154 = pneg %p153
    $region18: #{bnet_forward.1} parent=5 // pred_check_branch
      %156 = sbr.rel (%p154) target = $region20
    $region19: #{bnet_forward.1} parent=5 // pred_region
      // Predicated region
      $region21: #{bnet_forward.1} parent=19 // pred_check
        %p157 = pneg %p30
      $region22: #{bnet_forward.1} parent=19 // pred_check_branch
        %159 = sbr.rel (%p157) target = $region24
      $region23: #{bnet_forward.1} parent=19 // pred_region
        %p160 = scmp.lt.s32.totalorder %s10, 1
        %s161 = scalar_select %p160, %s10, 1
        %s162 = smul.addr %s161, 2
        %s163 = smul.addr %s162, 8
        %s164 = scalar_lea.vmem %s0, %s163
      $region24: #{bnet_forward.1} parent=19 // pred_fallthru
        _
      // Predicated region
      $region25: #{bnet_forward.1} parent=19 // pred_check
        %p165 = pneg %p77
      $region26: #{bnet_forward.1} parent=19 // pred_check_branch
        %167 = sbr.rel (%p165) target = $region28
      $region27: #{bnet_forward.1} parent=19 // pred_region
        %p168 = scmp.lt.s32.totalorder %s10, 1
        %s169 = scalar_select %p168, %s10, 1
        %s170 = smul.addr %s169, 4
        %s171 = smul.addr %s170, 8
        %s172 = scalar_lea.vmem %s2, %s171
      $region28: #{bnet_forward.1} parent=19 // pred_fallthru
        _
      // Predicated region
      $region29: #{bnet_forward.1} parent=19 // pred_check
        %p173 = pneg %p103
      $region30: #{bnet_forward.1} parent=19 // pred_check_branch
        %175 = sbr.rel (%p173) target = $region32
      $region31: #{bnet_forward.1} parent=19 // pred_region
        %p176 = scmp.lt.s32.totalorder %s10, 1
        %s177 = scalar_select %p176, %s10, 1
        %s178 = smul.addr %s177, 4
        %s179 = smul.addr %s178, 8
        %s180 = scalar_lea.vmem %s3, %s179
      $region32: #{bnet_forward.1} parent=19 // pred_fallthru
        _
    $region20: #{bnet_forward.1} parent=5 // pred_fallthru
      _
    %p181 = scmp.le.s32.totalorder 1, %s10
    %p182 = scmp.lt.s32.totalorder %s10, 3
    %p183 = pnand %p181, %p182
    %p184 = pneg %p183
    // Predicated region
    $region33: #{bnet_forward.1} parent=5 // pred_check
      _
    $region34: #{bnet_forward.1} parent=5 // pred_check_branch
      %186 = sbr.rel (%p183) target = $region36
    $region35: #{bnet_forward.1} parent=5 // pred_region
      %s187 = ssub.s32 %s10, 1
      %p188 = scmp.lt.s32.totalorder %s15, 1
      %s189 = scalar_select %p188, %s15, 1
      %s190 = smul.addr %s189, 2
      %s191 = smul.addr %s190, 8
      %s192 = scalar_lea.vmem %s0, %s191
      %p193 = pneg %p36
      %p194 = pneg %p33
      %p195 = pneg %p57
      %p196 = pneg %p54
      %p197 = scmp.lt.s32.totalorder %s15, 1
      %s198 = scalar_select %p197, %s15, 1
      %s199 = smul.addr %s198, 4
      %s200 = smul.addr %s199, 8
      %s201 = scalar_lea.vmem %s2, %s200
      %p202 = pneg %p83
      %p203 = pneg %p80
      %p204 = scmp.lt.s32.totalorder %s15, 1
      %s205 = scalar_select %p204, %s15, 1
      %s206 = smul.addr %s205, 4
      %s207 = smul.addr %s206, 8
      %s208 = scalar_lea.vmem %s3, %s207
      %p209 = pneg %p109
      %p210 = pneg %p106
      %p211 = pneg %p135
      %p212 = pneg %p132
      %p213 = scmp.lt.s32.totalorder %s15, 1
      %s214 = scalar_select %p213, %s15, 1
      %s215 = smul.addr %s214, 2
      %s216 = smul.addr %s215, 8
      %s217 = scalar_lea.vmem %s4, %s216
      %p218 = scmp.lt.s32.totalorder %s15, 1
      %s219 = scalar_select %p218, %s15, 1
      %s220 = smul.addr %s219, 2
      %s221 = smul.addr %s220, 8
      %s222 = scalar_lea.vmem %s0, %s221
      %p223 = scmp.lt.s32.totalorder %s15, 1
      %s224 = scalar_select %p223, %s15, 1
      %s225 = smul.addr %s224, 4
      %s226 = smul.addr %s225, 8
      %s227 = scalar_lea.vmem %s2, %s226
      %p228 = scmp.lt.s32.totalorder %s15, 1
      %s229 = scalar_select %p228, %s15, 1
      %s230 = smul.addr %s229, 4
      %s231 = smul.addr %s230, 8
      %s232 = scalar_lea.vmem %s3, %s231
      %p233 = scmp.lt.s32.totalorder %s15, 1
      %s234 = scalar_select %p233, %s15, 1
      %s235 = smul.addr %s234, 2
      %s236 = smul.addr %s235, 8
      %s237 = scalar_lea.vmem %s4, %s236
      %v239 = vlaneseq
      %v240 = vand.u32 %v239, 127
      %v241 = vadd.s32 %v240, 128
      %vm242 = vcmp.lt.s32.totalorder %v240, 0
      %v243 = vsub.s32 0, %v240
      %v244 = vsel %vm242, %v243, %v240
      %v245 = vshrl.u32 %v244, 4
      %v246 = vand.u32 %v244, 15
      %v247 = vsub.s32 0, %v246
      %v248 = vsel %vm242, %v247, %v246
      %vm249 = vcmp.lt.s32.totalorder %v241, 0
      %v250 = vsub.s32 0, %v241
      %v251 = vsel %vm249, %v250, %v241
      %v252 = vshrl.u32 %v251, 4
      %v253 = vand.u32 %v251, 15
      %v254 = vsub.s32 0, %v253
      %v255 = vsel %vm249, %v254, %v253
      %vm256 = vcmp.ne.s32.totalorder %v248, 0
      %vm257 = vcmp.ne.s32.totalorder %v255, 0
      %vm258 = vcmp.lt.s32.totalorder %v248, 0
      %vm259 = vcmp.lt.s32.totalorder %v255, 0
      %vm260 = vmand %vm258, %vm256
      %vm261 = vmand %vm259, %vm257
      %v262 = vadd.s32 %v248, 16
      %v263 = vadd.s32 %v255, 16
      %v264 = vsel %vm260, %v262, %v248
      %v265 = vsel %vm261, %v263, %v255
      %vm266 = vcmp.ge.s32.totalorder %v264, 1
      %vm267 = vcmp.ge.s32.totalorder %v265, 1
      %vm268 = vcmp.lt.s32.totalorder %v264, 15
      %vm269 = vcmp.lt.s32.totalorder %v265, 15
      %v270 = vld [vmem:[%s222] sm:$0xff]
      %v271 = vld [vmem:[%s222 + $0x8] sm:$0xff]
      %274 = vrot.lane.b32.xlu0 %v270, 17
      %v275 = vpop.permute.xlu0 %274
      %276 = vrot.lane.b32.xlu0 %v271, 17
      %v277 = vpop.permute.xlu0 %276
      %vm278 = vcmask 138240
      %v279 = vsel %vm278, %v275, %v277
      %v282 = vsel %vm278, 0.0, %v275
      %v283 = vsel %vm266, 1, 0
      %v284 = vsel %vm267, 1, 0
      %vm285 = vcmp.eq.s32.totalorder %v283, 1
      %vm286 = vcmp.eq.s32.totalorder %v284, 1
      %v287 = vsel %vm285, %v282, 0.0
      %v288 = vsel %vm286, %v279, 0.0
      %289 = vst [vmem:[#allocation2] sm:$0xff] %v287
      %290 = vst [vmem:[#allocation2 + $0x8] sm:$0xff] %v288
      %291 = vrot.lane.b32.xlu0 %v270, 16
      %v292 = vpop.permute.xlu0 %291
      %293 = vrot.lane.b32.xlu0 %v271, 16
      %v294 = vpop.permute.xlu0 %293
      %vm295 = vcmask 130048
      %v296 = vsel %vm295, %v292, %v294
      %v299 = vsel %vm295, 0.0, %v292
      %300 = vst [vmem:[#allocation2 + $0x10] sm:$0xff] %v299
      %301 = vst [vmem:[#allocation2 + $0x18] sm:$0xff] %v296
      %302 = vrot.lane.b32.xlu0 %v270, 15
      %v303 = vpop.permute.xlu0 %302
      %304 = vrot.lane.b32.xlu0 %v271, 15
      %v305 = vpop.permute.xlu0 %304
      %vm306 = vcmask 121856
      %v307 = vsel %vm306, %v303, %v305
      %v310 = vsel %vm306, 0.0, %v303
      %v311 = vsel %vm268, 1, 0
      %v312 = vsel %vm269, 1, 0
      %vm313 = vcmp.eq.s32.totalorder %v311, 1
      %vm314 = vcmp.eq.s32.totalorder %v312, 1
      %v315 = vsel %vm313, %v310, 0.0
      %v316 = vsel %vm314, %v307, 0.0
      %317 = vst [vmem:[#allocation2 + $0x20] sm:$0xff] %v315
      %318 = vst [vmem:[#allocation2 + $0x28] sm:$0xff] %v316
      %319 = vrot.lane.b32.xlu0 %v270, 1
      %v320 = vpop.permute.xlu0 %319
      %321 = vrot.lane.b32.xlu0 %v271, 1
      %v322 = vpop.permute.xlu0 %321
      %vm323 = vcmask 7168
      %v324 = vsel %vm323, %v320, %v322
      %v327 = vsel %vm323, 0.0, %v320
      %v328 = vsel %vm285, %v327, 0.0
      %v329 = vsel %vm286, %v324, 0.0
      %330 = vst [vmem:[#allocation2 + $0x30] sm:$0xff] %v328
      %331 = vst [vmem:[#allocation2 + $0x38] sm:$0xff] %v329
      %332 = vst [vmem:[#allocation2 + $0x40] sm:$0xff] %v270
      %333 = vst [vmem:[#allocation2 + $0x48] sm:$0xff] %v271
      %334 = vrot.lane.b32.xlu0 %v270, 127
      %v335 = vpop.permute.xlu0 %334
      %336 = vrot.lane.b32.xlu0 %v271, 127
      %v337 = vpop.permute.xlu0 %336
      %vm338 = vcmask 1039360
      %v339 = vsel %vm338, %v335, %v337
      %v342 = vsel %vm338, %v337, 0.0
      %v343 = vsel %vm313, %v339, 0.0
      %v344 = vsel %vm314, %v342, 0.0
      %345 = vst [vmem:[#allocation2 + $0x50] sm:$0xff] %v343
      %346 = vst [vmem:[#allocation2 + $0x58] sm:$0xff] %v344
      %347 = vrot.lane.b32.xlu0 %v270, 113
      %v348 = vpop.permute.xlu0 %347
      %349 = vrot.lane.b32.xlu0 %v271, 113
      %v350 = vpop.permute.xlu0 %349
      %vm351 = vcmask 924672
      %v352 = vsel %vm351, %v348, %v350
      %v355 = vsel %vm351, %v350, 0.0
      %v356 = vsel %vm285, %v352, 0.0
      %v357 = vsel %vm286, %v355, 0.0
      %358 = vst [vmem:[#allocation2 + $0x60] sm:$0xff] %v356
      %359 = vst [vmem:[#allocation2 + $0x68] sm:$0xff] %v357
      %360 = vrot.lane.b32.xlu0 %v270, 112
      %v361 = vpop.permute.xlu0 %360
      %362 = vrot.lane.b32.xlu0 %v271, 112
      %v363 = vpop.permute.xlu0 %362
      %vm364 = vcmask 916480
      %v365 = vsel %vm364, %v361, %v363
      %v368 = vsel %vm364, %v363, 0.0
      %369 = vst [vmem:[#allocation2 + $0x70] sm:$0xff] %v365
      %370 = vst [vmem:[#allocation2 + $0x78] sm:$0xff] %v368
      %371 = vrot.lane.b32.xlu0 %v270, 111
      %v372 = vpop.permute.xlu0 %371
      %373 = vrot.lane.b32.xlu0 %v271, 111
      %v374 = vpop.permute.xlu0 %373
      %vm375 = vcmask 908288
      %v376 = vsel %vm375, %v372, %v374
      %v379 = vsel %vm375, %v374, 0.0
      %v380 = vsel %vm313, %v376, 0.0
      %v381 = vsel %vm314, %v379, 0.0
      %382 = vst [vmem:[#allocation2 + $0x80] sm:$0xff] %v380
      %383 = vst [vmem:[#allocation2 + $0x88] sm:$0xff] %v381
      %v384 = vld [vmem:[%s1] sm:$0xf]
      %v385 = vld [vmem:[#allocation2] sm:$0xff]
      %v386 = vld [vmem:[#allocation2 + $0x8] sm:$0xff]
      %v387 = vld [vmem:[#allocation2 + $0x10] sm:$0xff]
      %v388 = vld [vmem:[#allocation2 + $0x18] sm:$0xff]
      %v389 = vld [vmem:[#allocation2 + $0x20] sm:$0xff]
      %v390 = vld [vmem:[#allocation2 + $0x28] sm:$0xff]
      %v391 = vld [vmem:[#allocation2 + $0x30] sm:$0xff]
      %v392 = vld [vmem:[#allocation2 + $0x38] sm:$0xff]
      %v393 = vld [vmem:[#allocation2 + $0x40] sm:$0xff]
      %v394 = vld [vmem:[#allocation2 + $0x48] sm:$0xff]
      %v395 = vld [vmem:[#allocation2 + $0x50] sm:$0xff]
      %v396 = vld [vmem:[#allocation2 + $0x58] sm:$0xff]
      %v397 = vld [vmem:[#allocation2 + $0x60] sm:$0xff]
      %v398 = vld [vmem:[#allocation2 + $0x68] sm:$0xff]
      %v399 = vld [vmem:[#allocation2 + $0x70] sm:$0xff]
      %v400 = vld [vmem:[#allocation2 + $0x78] sm:$0xff]
      %v401 = vld [vmem:[#allocation2 + $0x80] sm:$0xff]
      %v402 = vld [vmem:[#allocation2 + $0x88] sm:$0xff]
      %v403 = vpack.c.bf16 %v387, %v385
      %v404 = vpack.c.bf16 %v388, %v386
      %v405 = vpack.c.bf16 %v391, %v389
      %v406 = vpack.c.bf16 %v392, %v390
      %v407 = vpack.c.bf16 %v395, %v393
      %v408 = vpack.c.bf16 %v396, %v394
      %v409 = vpack.c.bf16 %v399, %v397
      %v410 = vpack.c.bf16 %v400, %v398
      %v411 = vpack.c.bf16 %v401, %v401
      %v412 = vpack.c.bf16 %v402, %v402
      %vm413 = vcmask 588800
      %v415 = vsel %vm413, %v384, 0
      %vm417 = vcmask 1043456
      %v419 = vsel %vm417, %v411, 0
      %v422 = vsel %vm417, %v412, 0
      %424 = vmatprep.subr.bf16.mxu0 0
      %425 = vmatpush1.bf16.msra.mxu0 0
      %426 = vmatprep.subr.bf16.mxu0 0
      %427 = vmatpush1.bf16.msra.mxu0 0
      %428 = vmatprep.subr.bf16.mxu0 0
      %429 = vmatpush1.bf16.msra.mxu0 0
      %430 = vmatprep.subr.bf16.mxu0 %v422
      %431 = vmatpush1.bf16.msra.mxu0 %v419
      %432 = vmatprep.subr.bf16.mxu0 %v410
      %433 = vmatpush1.bf16.msra.mxu0 %v409
      %434 = vmatprep.subr.bf16.mxu0 %v408
      %435 = vmatpush1.bf16.msra.mxu0 %v407
      %436 = vmatprep.subr.bf16.mxu0 %v406
      %437 = vmatpush1.bf16.msra.mxu0 %v405
      %438 = vmatprep.subr.bf16.mxu0 %v404
      %439 = vmatpush1.bf16.msra.mxu0 %v403
      %440 = vmatprep.subr.bf16.mxu0 0
      %441 = vmatpush2.bf16.msra.mxu0 0
      %442 = vmatprep.subr.bf16.mxu0 0
      %443 = vmatpush2.bf16.msra.mxu0 0
      %444 = vmatprep.subr.bf16.mxu0 0
      %445 = vmatpush2.bf16.msra.mxu0 0
      %446 = vmatprep.subr.bf16.mxu0 0
      %447 = vmatpush2.bf16.msra.mxu0 0
      %448 = vmatprep.subr.bf16.mxu0 0
      %449 = vmatpush2.bf16.msra.mxu0 0
      %450 = vmatprep.subr.bf16.mxu0 0
      %451 = vmatpush2.bf16.msra.mxu0 0
      %452 = vmatprep.subr.bf16.mxu0 0
      %453 = vmatpush2.bf16.msra.mxu0 0
      %454 = vmatprep.subr.bf16.mxu0 0
      %455 = vmatpush2.bf16.msra.mxu0 0
      %456 = vmatprep.mubr.bf16.mxu0 0
      %457 = vmatmul.mubr.bf16.gmra.mxu0 %v415
      %v458 = vpop.f32.mrf.mxu0
      %v459 = vadd.f32 0.0, %v458
      %v460 = vpop.f32.mrf.mxu0
      %v461 = vadd.f32 0.0, %v460
      %v462 = vpop.f32.mrf.mxu0
      %v463 = vpop.f32.mrf.mxu0
      %464 = vdwg.mxu0
      %v465 = vld [vmem:[%s227] sm:$0xff]
      %467 = vset.pattern.permute.xlu0 0
      %468 = vperm.xlu0 %467, %v465
      %v469 = vpop.permute.xlu0 %468
      %v471 = vmul.f32 %v459, %v469
      %v472 = vmul.f32 %v461, %v469
      %v473 = vld [vmem:[%s232] sm:$0xff]
      %475 = vset.pattern.permute.xlu0 0
      %476 = vperm.xlu0 %475, %v473
      %v477 = vpop.permute.xlu0 %476
      %v479 = vadd.f32 %v471, %v477
      %v480 = vadd.f32 %v472, %v477
      %v481 = vmax.f32 %v479, 0.0
      %v482 = vmax.f32 %v480, 0.0
      %485 = vrot.lane.b32.xlu0 %v481, 17
      %v486 = vpop.permute.xlu0 %485
      %487 = vrot.lane.b32.xlu0 %v482, 17
      %v488 = vpop.permute.xlu0 %487
      %v489 = vsel %vm278, %v486, %v488
      %v492 = vsel %vm278, 0.0, %v486
      %v493 = vsel %vm285, %v492, 0.0
      %v494 = vsel %vm286, %v489, 0.0
      %495 = vst [vmem:[#allocation2] sm:$0xff] %v493
      %496 = vst [vmem:[#allocation2 + $0x8] sm:$0xff] %v494
      %497 = vrot.lane.b32.xlu0 %v481, 16
      %v498 = vpop.permute.xlu0 %497
      %499 = vrot.lane.b32.xlu0 %v482, 16
      %v500 = vpop.permute.xlu0 %499
      %v501 = vsel %vm295, %v498, %v500
      %v504 = vsel %vm295, 0.0, %v498
      %505 = vst [vmem:[#allocation2 + $0x10] sm:$0xff] %v504
      %506 = vst [vmem:[#allocation2 + $0x18] sm:$0xff] %v501
      %507 = vrot.lane.b32.xlu0 %v481, 15
      %v508 = vpop.permute.xlu0 %507
      %509 = vrot.lane.b32.xlu0 %v482, 15
      %v510 = vpop.permute.xlu0 %509
      %v511 = vsel %vm306, %v508, %v510
      %v514 = vsel %vm306, 0.0, %v508
      %v515 = vsel %vm313, %v514, 0.0
      %v516 = vsel %vm314, %v511, 0.0
      %517 = vst [vmem:[#allocation2 + $0x20] sm:$0xff] %v515
      %518 = vst [vmem:[#allocation2 + $0x28] sm:$0xff] %v516
      %519 = vrot.lane.b32.xlu0 %v481, 1
      %v520 = vpop.permute.xlu0 %519
      %521 = vrot.lane.b32.xlu0 %v482, 1
      %v522 = vpop.permute.xlu0 %521
      %v523 = vsel %vm323, %v520, %v522
      %v526 = vsel %vm323, 0.0, %v520
      %v527 = vsel %vm285, %v526, 0.0
      %v528 = vsel %vm286, %v523, 0.0
      %529 = vst [vmem:[#allocation2 + $0x30] sm:$0xff] %v527
      %530 = vst [vmem:[#allocation2 + $0x38] sm:$0xff] %v528
      %531 = vst [vmem:[#allocation2 + $0x40] sm:$0xff] %v481
      %532 = vst [vmem:[#allocation2 + $0x48] sm:$0xff] %v482
      %533 = vrot.lane.b32.xlu0 %v481, 127
      %v534 = vpop.permute.xlu0 %533
      %535 = vrot.lane.b32.xlu0 %v482, 127
      %v536 = vpop.permute.xlu0 %535
      %v537 = vsel %vm338, %v534, %v536
      %v540 = vsel %vm338, %v536, 0.0
      %v541 = vsel %vm313, %v537, 0.0
      %v542 = vsel %vm314, %v540, 0.0
      %543 = vst [vmem:[#allocation2 + $0x50] sm:$0xff] %v541
      %544 = vst [vmem:[#allocation2 + $0x58] sm:$0xff] %v542
      %545 = vrot.lane.b32.xlu0 %v481, 113
      %v546 = vpop.permute.xlu0 %545
      %547 = vrot.lane.b32.xlu0 %v482, 113
      %v548 = vpop.permute.xlu0 %547
      %v549 = vsel %vm351, %v546, %v548
      %v552 = vsel %vm351, %v548, 0.0
      %v553 = vsel %vm285, %v549, 0.0
      %v554 = vsel %vm286, %v552, 0.0
      %555 = vst [vmem:[#allocation2 + $0x60] sm:$0xff] %v553
      %556 = vst [vmem:[#allocation2 + $0x68] sm:$0xff] %v554
      %557 = vrot.lane.b32.xlu0 %v481, 112
      %v558 = vpop.permute.xlu0 %557
      %559 = vrot.lane.b32.xlu0 %v482, 112
      %v560 = vpop.permute.xlu0 %559
      %v561 = vsel %vm364, %v558, %v560
      %v564 = vsel %vm364, %v560, 0.0
      %565 = vst [vmem:[#allocation2 + $0x70] sm:$0xff] %v561
      %566 = vst [vmem:[#allocation2 + $0x78] sm:$0xff] %v564
      %567 = vrot.lane.b32.xlu0 %v481, 111
      %v568 = vpop.permute.xlu0 %567
      %569 = vrot.lane.b32.xlu0 %v482, 111
      %v570 = vpop.permute.xlu0 %569
      %v571 = vsel %vm375, %v568, %v570
      %v574 = vsel %vm375, %v570, 0.0
      %v575 = vsel %vm313, %v571, 0.0
      %v576 = vsel %vm314, %v574, 0.0
      %577 = vst [vmem:[#allocation2 + $0x80] sm:$0xff] %v575
      %578 = vst [vmem:[#allocation2 + $0x88] sm:$0xff] %v576
      %s579 = scalar_lea.vmem %s1, 4
      %v580 = vld [vmem:[%s579] sm:$0xf]
      %v581 = vld [vmem:[#allocation2] sm:$0xff]
      %v582 = vld [vmem:[#allocation2 + $0x8] sm:$0xff]
      %v583 = vld [vmem:[#allocation2 + $0x10] sm:$0xff]
      %v584 = vld [vmem:[#allocation2 + $0x18] sm:$0xff]
      %v585 = vld [vmem:[#allocation2 + $0x20] sm:$0xff]
      %v586 = vld [vmem:[#allocation2 + $0x28] sm:$0xff]
      %v587 = vld [vmem:[#allocation2 + $0x30] sm:$0xff]
      %v588 = vld [vmem:[#allocation2 + $0x38] sm:$0xff]
      %v589 = vld [vmem:[#allocation2 + $0x40] sm:$0xff]
      %v590 = vld [vmem:[#allocation2 + $0x48] sm:$0xff]
      %v591 = vld [vmem:[#allocation2 + $0x50] sm:$0xff]
      %v592 = vld [vmem:[#allocation2 + $0x58] sm:$0xff]
      %v593 = vld [vmem:[#allocation2 + $0x60] sm:$0xff]
      %v594 = vld [vmem:[#allocation2 + $0x68] sm:$0xff]
      %v595 = vld [vmem:[#allocation2 + $0x70] sm:$0xff]
      %v596 = vld [vmem:[#allocation2 + $0x78] sm:$0xff]
      %v597 = vld [vmem:[#allocation2 + $0x80] sm:$0xff]
      %v598 = vld [vmem:[#allocation2 + $0x88] sm:$0xff]
      %v599 = vpack.c.bf16 %v583, %v581
      %v600 = vpack.c.bf16 %v584, %v582
      %v601 = vpack.c.bf16 %v587, %v585
      %v602 = vpack.c.bf16 %v588, %v586
      %v603 = vpack.c.bf16 %v591, %v589
      %v604 = vpack.c.bf16 %v592, %v590
      %v605 = vpack.c.bf16 %v595, %v593
      %v606 = vpack.c.bf16 %v596, %v594
      %v607 = vpack.c.bf16 %v597, %v597
      %v608 = vpack.c.bf16 %v598, %v598
      %v610 = vsel %vm413, %v580, 0
      %v613 = vsel %vm417, %v607, 0
      %v616 = vsel %vm417, %v608, 0
      %618 = vmatprep.subr.bf16.mxu0 0
      %619 = vmatpush1.bf16.msra.mxu0 0
      %620 = vmatprep.subr.bf16.mxu0 0
      %621 = vmatpush1.bf16.msra.mxu0 0
      %622 = vmatprep.subr.bf16.mxu0 0
      %623 = vmatpush1.bf16.msra.mxu0 0
      %624 = vmatprep.subr.bf16.mxu0 %v616
      %625 = vmatpush1.bf16.msra.mxu0 %v613
      %626 = vmatprep.subr.bf16.mxu0 %v606
      %627 = vmatpush1.bf16.msra.mxu0 %v605
      %628 = vmatprep.subr.bf16.mxu0 %v604
      %629 = vmatpush1.bf16.msra.mxu0 %v603
      %630 = vmatprep.subr.bf16.mxu0 %v602
      %631 = vmatpush1.bf16.msra.mxu0 %v601
      %632 = vmatprep.subr.bf16.mxu0 %v600
      %633 = vmatpush1.bf16.msra.mxu0 %v599
      %634 = vmatprep.subr.bf16.mxu0 0
      %635 = vmatpush2.bf16.msra.mxu0 0
      %636 = vmatprep.subr.bf16.mxu0 0
      %637 = vmatpush2.bf16.msra.mxu0 0
      %638 = vmatprep.subr.bf16.mxu0 0
      %639 = vmatpush2.bf16.msra.mxu0 0
      %640 = vmatprep.subr.bf16.mxu0 0
      %641 = vmatpush2.bf16.msra.mxu0 0
      %642 = vmatprep.subr.bf16.mxu0 0
      %643 = vmatpush2.bf16.msra.mxu0 0
      %644 = vmatprep.subr.bf16.mxu0 0
      %645 = vmatpush2.bf16.msra.mxu0 0
      %646 = vmatprep.subr.bf16.mxu0 0
      %647 = vmatpush2.bf16.msra.mxu0 0
      %648 = vmatprep.subr.bf16.mxu0 0
      %649 = vmatpush2.bf16.msra.mxu0 0
      %650 = vmatprep.mubr.bf16.mxu0 0
      %651 = vmatmul.mubr.bf16.gmra.mxu0 %v610
      %v652 = vpop.f32.mrf.mxu0
      %v653 = vadd.f32 0.0, %v652
      %v654 = vpop.f32.mrf.mxu0
      %v655 = vadd.f32 0.0, %v654
      %v656 = vpop.f32.mrf.mxu0
      %v657 = vpop.f32.mrf.mxu0
      %658 = vdwg.mxu0
      %s659 = scalar_lea.vmem %s227, 8
      %v660 = vld [vmem:[%s659] sm:$0xff]
      %662 = vset.pattern.permute.xlu0 0
      %663 = vperm.xlu0 %662, %v660
      %v664 = vpop.permute.xlu0 %663
      %v666 = vmul.f32 %v653, %v664
      %v667 = vmul.f32 %v655, %v664
      %s668 = scalar_lea.vmem %s232, 8
      %v669 = vld [vmem:[%s668] sm:$0xff]
      %671 = vset.pattern.permute.xlu0 0
      %672 = vperm.xlu0 %671, %v669
      %v673 = vpop.permute.xlu0 %672
      %v675 = vadd.f32 %v666, %v673
      %v676 = vadd.f32 %v667, %v673
      %v677 = vadd.f32 %v270, %v675
      %v678 = vadd.f32 %v271, %v676
      %v679 = vmax.f32 %v677, 0.0
      %v680 = vmax.f32 %v678, 0.0
      %683 = vrot.lane.b32.xlu0 %v679, 17
      %v684 = vpop.permute.xlu0 %683
      %685 = vrot.lane.b32.xlu0 %v680, 17
      %v686 = vpop.permute.xlu0 %685
      %v687 = vsel %vm278, %v684, %v686
      %v690 = vsel %vm278, 0.0, %v684
      %v691 = vsel %vm285, %v690, 0.0
      %v692 = vsel %vm286, %v687, 0.0
      %693 = vst [vmem:[#allocation2] sm:$0xff] %v691
      %694 = vst [vmem:[#allocation2 + $0x8] sm:$0xff] %v692
      %695 = vrot.lane.b32.xlu0 %v679, 16
      %v696 = vpop.permute.xlu0 %695
      %697 = vrot.lane.b32.xlu0 %v680, 16
      %v698 = vpop.permute.xlu0 %697
      %v699 = vsel %vm295, %v696, %v698
      %v702 = vsel %vm295, 0.0, %v696
      %703 = vst [vmem:[#allocation2 + $0x10] sm:$0xff] %v702
      %704 = vst [vmem:[#allocation2 + $0x18] sm:$0xff] %v699
      %705 = vrot.lane.b32.xlu0 %v679, 15
      %v706 = vpop.permute.xlu0 %705
      %707 = vrot.lane.b32.xlu0 %v680, 15
      %v708 = vpop.permute.xlu0 %707
      %v709 = vsel %vm306, %v706, %v708
      %v712 = vsel %vm306, 0.0, %v706
      %v713 = vsel %vm313, %v712, 0.0
      %v714 = vsel %vm314, %v709, 0.0
      %715 = vst [vmem:[#allocation2 + $0x20] sm:$0xff] %v713
      %716 = vst [vmem:[#allocation2 + $0x28] sm:$0xff] %v714
      %717 = vrot.lane.b32.xlu0 %v679, 1
      %v718 = vpop.permute.xlu0 %717
      %719 = vrot.lane.b32.xlu0 %v680, 1
      %v720 = vpop.permute.xlu0 %719
      %v721 = vsel %vm323, %v718, %v720
      %v724 = vsel %vm323, 0.0, %v718
      %v725 = vsel %vm285, %v724, 0.0
      %v726 = vsel %vm286, %v721, 0.0
      %727 = vst [vmem:[#allocation2 + $0x30] sm:$0xff] %v725
      %728 = vst [vmem:[#allocation2 + $0x38] sm:$0xff] %v726
      %729 = vst [vmem:[#allocation2 + $0x40] sm:$0xff] %v679
      %730 = vst [vmem:[#allocation2 + $0x48] sm:$0xff] %v680
      %731 = vrot.lane.b32.xlu0 %v679, 127
      %v732 = vpop.permute.xlu0 %731
      %733 = vrot.lane.b32.xlu0 %v680, 127
      %v734 = vpop.permute.xlu0 %733
      %v735 = vsel %vm338, %v732, %v734
      %v738 = vsel %vm338, %v734, 0.0
      %v739 = vsel %vm313, %v735, 0.0
      %v740 = vsel %vm314, %v738, 0.0
      %741 = vst [vmem:[#allocation2 + $0x50] sm:$0xff] %v739
      %742 = vst [vmem:[#allocation2 + $0x58] sm:$0xff] %v740
      %743 = vrot.lane.b32.xlu0 %v679, 113
      %v744 = vpop.permute.xlu0 %743
      %745 = vrot.lane.b32.xlu0 %v680, 113
      %v746 = vpop.permute.xlu0 %745
      %v747 = vsel %vm351, %v744, %v746
      %v750 = vsel %vm351, %v746, 0.0
      %v751 = vsel %vm285, %v747, 0.0
      %v752 = vsel %vm286, %v750, 0.0
      %753 = vst [vmem:[#allocation2 + $0x60] sm:$0xff] %v751
      %754 = vst [vmem:[#allocation2 + $0x68] sm:$0xff] %v752
      %755 = vrot.lane.b32.xlu0 %v679, 112
      %v756 = vpop.permute.xlu0 %755
      %757 = vrot.lane.b32.xlu0 %v680, 112
      %v758 = vpop.permute.xlu0 %757
      %v759 = vsel %vm364, %v756, %v758
      %v762 = vsel %vm364, %v758, 0.0
      %763 = vst [vmem:[#allocation2 + $0x70] sm:$0xff] %v759
      %764 = vst [vmem:[#allocation2 + $0x78] sm:$0xff] %v762
      %765 = vrot.lane.b32.xlu0 %v679, 111
      %v766 = vpop.permute.xlu0 %765
      %767 = vrot.lane.b32.xlu0 %v680, 111
      %v768 = vpop.permute.xlu0 %767
      %v769 = vsel %vm375, %v766, %v768
      %v772 = vsel %vm375, %v768, 0.0
      %v773 = vsel %vm313, %v769, 0.0
      %v774 = vsel %vm314, %v772, 0.0
      %775 = vst [vmem:[#allocation2 + $0x80] sm:$0xff] %v773
      %776 = vst [vmem:[#allocation2 + $0x88] sm:$0xff] %v774
      %s777 = scalar_lea.vmem %s1, 8
      %v778 = vld [vmem:[%s777] sm:$0xf]
      %v779 = vld [vmem:[#allocation2] sm:$0xff]
      %v780 = vld [vmem:[#allocation2 + $0x8] sm:$0xff]
      %v781 = vld [vmem:[#allocation2 + $0x10] sm:$0xff]
      %v782 = vld [vmem:[#allocation2 + $0x18] sm:$0xff]
      %v783 = vld [vmem:[#allocation2 + $0x20] sm:$0xff]
      %v784 = vld [vmem:[#allocation2 + $0x28] sm:$0xff]
      %v785 = vld [vmem:[#allocation2 + $0x30] sm:$0xff]
      %v786 = vld [vmem:[#allocation2 + $0x38] sm:$0xff]
      %v787 = vld [vmem:[#allocation2 + $0x40] sm:$0xff]
      %v788 = vld [vmem:[#allocation2 + $0x48] sm:$0xff]
      %v789 = vld [vmem:[#allocation2 + $0x50] sm:$0xff]
      %v790 = vld [vmem:[#allocation2 + $0x58] sm:$0xff]
      %v791 = vld [vmem:[#allocation2 + $0x60] sm:$0xff]
      %v792 = vld [vmem:[#allocation2 + $0x68] sm:$0xff]
      %v793 = vld [vmem:[#allocation2 + $0x70] sm:$0xff]
      %v794 = vld [vmem:[#allocation2 + $0x78] sm:$0xff]
      %v795 = vld [vmem:[#allocation2 + $0x80] sm:$0xff]
      %v796 = vld [vmem:[#allocation2 + $0x88] sm:$0xff]
      %v797 = vpack.c.bf16 %v781, %v779
      %v798 = vpack.c.bf16 %v782, %v780
      %v799 = vpack.c.bf16 %v785, %v783
      %v800 = vpack.c.bf16 %v786, %v784
      %v801 = vpack.c.bf16 %v789, %v787
      %v802 = vpack.c.bf16 %v790, %v788
      %v803 = vpack.c.bf16 %v793, %v791
      %v804 = vpack.c.bf16 %v794, %v792
      %v805 = vpack.c.bf16 %v795, %v795
      %v806 = vpack.c.bf16 %v796, %v796
      %v808 = vsel %vm413, %v778, 0
      %v811 = vsel %vm417, %v805, 0
      %v814 = vsel %vm417, %v806, 0
      %816 = vmatprep.subr.bf16.mxu0 0
      %817 = vmatpush1.bf16.msra.mxu0 0
      %818 = vmatprep.subr.bf16.mxu0 0
      %819 = vmatpush1.bf16.msra.mxu0 0
      %820 = vmatprep.subr.bf16.mxu0 0
      %821 = vmatpush1.bf16.msra.mxu0 0
      %822 = vmatprep.subr.bf16.mxu0 %v814
      %823 = vmatpush1.bf16.msra.mxu0 %v811
      %824 = vmatprep.subr.bf16.mxu0 %v804
      %825 = vmatpush1.bf16.msra.mxu0 %v803
      %826 = vmatprep.subr.bf16.mxu0 %v802
      %827 = vmatpush1.bf16.msra.mxu0 %v801
      %828 = vmatprep.subr.bf16.mxu0 %v800
      %829 = vmatpush1.bf16.msra.mxu0 %v799
      %830 = vmatprep.subr.bf16.mxu0 %v798
      %831 = vmatpush1.bf16.msra.mxu0 %v797
      %832 = vmatprep.subr.bf16.mxu0 0
      %833 = vmatpush2.bf16.msra.mxu0 0
      %834 = vmatprep.subr.bf16.mxu0 0
      %835 = vmatpush2.bf16.msra.mxu0 0
      %836 = vmatprep.subr.bf16.mxu0 0
      %837 = vmatpush2.bf16.msra.mxu0 0
      %838 = vmatprep.subr.bf16.mxu0 0
      %839 = vmatpush2.bf16.msra.mxu0 0
      %840 = vmatprep.subr.bf16.mxu0 0
      %841 = vmatpush2.bf16.msra.mxu0 0
      %842 = vmatprep.subr.bf16.mxu0 0
      %843 = vmatpush2.bf16.msra.mxu0 0
      %844 = vmatprep.subr.bf16.mxu0 0
      %845 = vmatpush2.bf16.msra.mxu0 0
      %846 = vmatprep.subr.bf16.mxu0 0
      %847 = vmatpush2.bf16.msra.mxu0 0
      %848 = vmatprep.mubr.bf16.mxu0 0
      %849 = vmatmul.mubr.bf16.gmra.mxu0 %v808
      %v850 = vpop.f32.mrf.mxu0
      %v851 = vadd.f32 0.0, %v850
      %v852 = vpop.f32.mrf.mxu0
      %v853 = vadd.f32 0.0, %v852
      %v854 = vpop.f32.mrf.mxu0
      %v855 = vpop.f32.mrf.mxu0
      %856 = vdwg.mxu0
      %s857 = scalar_lea.vmem %s227, 16
      %v858 = vld [vmem:[%s857] sm:$0xff]
      %860 = vset.pattern.permute.xlu0 0
      %861 = vperm.xlu0 %860, %v858
      %v862 = vpop.permute.xlu0 %861
      %v864 = vmul.f32 %v851, %v862
      %v865 = vmul.f32 %v853, %v862
      %s866 = scalar_lea.vmem %s232, 16
      %v867 = vld [vmem:[%s866] sm:$0xff]
      %869 = vset.pattern.permute.xlu0 0
      %870 = vperm.xlu0 %869, %v867
      %v871 = vpop.permute.xlu0 %870
      %v873 = vadd.f32 %v864, %v871
      %v874 = vadd.f32 %v865, %v871
      %v875 = vmax.f32 %v873, 0.0
      %v876 = vmax.f32 %v874, 0.0
      %879 = vrot.lane.b32.xlu0 %v875, 17
      %v880 = vpop.permute.xlu0 %879
      %881 = vrot.lane.b32.xlu0 %v876, 17
      %v882 = vpop.permute.xlu0 %881
      %v883 = vsel %vm278, %v880, %v882
      %v886 = vsel %vm278, 0.0, %v880
      %v887 = vsel %vm285, %v886, 0.0
      %v888 = vsel %vm286, %v883, 0.0
      %889 = vst [vmem:[#allocation2] sm:$0xff] %v887
      %890 = vst [vmem:[#allocation2 + $0x8] sm:$0xff] %v888
      %891 = vrot.lane.b32.xlu0 %v875, 16
      %v892 = vpop.permute.xlu0 %891
      %893 = vrot.lane.b32.xlu0 %v876, 16
      %v894 = vpop.permute.xlu0 %893
      %v895 = vsel %vm295, %v892, %v894
      %v898 = vsel %vm295, 0.0, %v892
      %899 = vst [vmem:[#allocation2 + $0x10] sm:$0xff] %v898
      %900 = vst [vmem:[#allocation2 + $0x18] sm:$0xff] %v895
      %901 = vrot.lane.b32.xlu0 %v875, 15
      %v902 = vpop.permute.xlu0 %901
      %903 = vrot.lane.b32.xlu0 %v876, 15
      %v904 = vpop.permute.xlu0 %903
      %v905 = vsel %vm306, %v902, %v904
      %v908 = vsel %vm306, 0.0, %v902
      %v909 = vsel %vm313, %v908, 0.0
      %v910 = vsel %vm314, %v905, 0.0
      %911 = vst [vmem:[#allocation2 + $0x20] sm:$0xff] %v909
      %912 = vst [vmem:[#allocation2 + $0x28] sm:$0xff] %v910
      %913 = vrot.lane.b32.xlu0 %v875, 1
      %v914 = vpop.permute.xlu0 %913
      %915 = vrot.lane.b32.xlu0 %v876, 1
      %v916 = vpop.permute.xlu0 %915
      %v917 = vsel %vm323, %v914, %v916
      %v920 = vsel %vm323, 0.0, %v914
      %v921 = vsel %vm285, %v920, 0.0
      %v922 = vsel %vm286, %v917, 0.0
      %923 = vst [vmem:[#allocation2 + $0x30] sm:$0xff] %v921
      %924 = vst [vmem:[#allocation2 + $0x38] sm:$0xff] %v922
      %925 = vst [vmem:[#allocation2 + $0x40] sm:$0xff] %v875
      %926 = vst [vmem:[#allocation2 + $0x48] sm:$0xff] %v876
      %927 = vrot.lane.b32.xlu0 %v875, 127
      %v928 = vpop.permute.xlu0 %927
      %929 = vrot.lane.b32.xlu0 %v876, 127
      %v930 = vpop.permute.xlu0 %929
      %v931 = vsel %vm338, %v928, %v930
      %v934 = vsel %vm338, %v930, 0.0
      %v935 = vsel %vm313, %v931, 0.0
      %v936 = vsel %vm314, %v934, 0.0
      %937 = vst [vmem:[#allocation2 + $0x50] sm:$0xff] %v935
      %938 = vst [vmem:[#allocation2 + $0x58] sm:$0xff] %v936
      %939 = vrot.lane.b32.xlu0 %v875, 113
      %v940 = vpop.permute.xlu0 %939
      %941 = vrot.lane.b32.xlu0 %v876, 113
      %v942 = vpop.permute.xlu0 %941
      %v943 = vsel %vm351, %v940, %v942
      %v946 = vsel %vm351, %v942, 0.0
      %v947 = vsel %vm285, %v943, 0.0
      %v948 = vsel %vm286, %v946, 0.0
      %949 = vst [vmem:[#allocation2 + $0x60] sm:$0xff] %v947
      %950 = vst [vmem:[#allocation2 + $0x68] sm:$0xff] %v948
      %951 = vrot.lane.b32.xlu0 %v875, 112
      %v952 = vpop.permute.xlu0 %951
      %953 = vrot.lane.b32.xlu0 %v876, 112
      %v954 = vpop.permute.xlu0 %953
      %v955 = vsel %vm364, %v952, %v954
      %v958 = vsel %vm364, %v954, 0.0
      %959 = vst [vmem:[#allocation2 + $0x70] sm:$0xff] %v955
      %960 = vst [vmem:[#allocation2 + $0x78] sm:$0xff] %v958
      %961 = vrot.lane.b32.xlu0 %v875, 111
      %v962 = vpop.permute.xlu0 %961
      %963 = vrot.lane.b32.xlu0 %v876, 111
      %v964 = vpop.permute.xlu0 %963
      %v965 = vsel %vm375, %v962, %v964
      %v968 = vsel %vm375, %v964, 0.0
      %v969 = vsel %vm313, %v965, 0.0
      %v970 = vsel %vm314, %v968, 0.0
      %971 = vst [vmem:[#allocation2 + $0x80] sm:$0xff] %v969
      %972 = vst [vmem:[#allocation2 + $0x88] sm:$0xff] %v970
      %s973 = scalar_lea.vmem %s1, 12
      %v974 = vld [vmem:[%s973] sm:$0xf]
      %v975 = vld [vmem:[#allocation2] sm:$0xff]
      %v976 = vld [vmem:[#allocation2 + $0x8] sm:$0xff]
      %v977 = vld [vmem:[#allocation2 + $0x10] sm:$0xff]
      %v978 = vld [vmem:[#allocation2 + $0x18] sm:$0xff]
      %v979 = vld [vmem:[#allocation2 + $0x20] sm:$0xff]
      %v980 = vld [vmem:[#allocation2 + $0x28] sm:$0xff]
      %v981 = vld [vmem:[#allocation2 + $0x30] sm:$0xff]
      %v982 = vld [vmem:[#allocation2 + $0x38] sm:$0xff]
      %v983 = vld [vmem:[#allocation2 + $0x40] sm:$0xff]
      %v984 = vld [vmem:[#allocation2 + $0x48] sm:$0xff]
      %v985 = vld [vmem:[#allocation2 + $0x50] sm:$0xff]
      %v986 = vld [vmem:[#allocation2 + $0x58] sm:$0xff]
      %v987 = vld [vmem:[#allocation2 + $0x60] sm:$0xff]
      %v988 = vld [vmem:[#allocation2 + $0x68] sm:$0xff]
      %v989 = vld [vmem:[#allocation2 + $0x70] sm:$0xff]
      %v990 = vld [vmem:[#allocation2 + $0x78] sm:$0xff]
      %v991 = vld [vmem:[#allocation2 + $0x80] sm:$0xff]
      %v992 = vld [vmem:[#allocation2 + $0x88] sm:$0xff]
      %v993 = vpack.c.bf16 %v977, %v975
      %v994 = vpack.c.bf16 %v978, %v976
      %v995 = vpack.c.bf16 %v981, %v979
      %v996 = vpack.c.bf16 %v982, %v980
      %v997 = vpack.c.bf16 %v985, %v983
      %v998 = vpack.c.bf16 %v986, %v984
      %v999 = vpack.c.bf16 %v989, %v987
      %v1000 = vpack.c.bf16 %v990, %v988
      %v1001 = vpack.c.bf16 %v991, %v991
      %v1002 = vpack.c.bf16 %v992, %v992
      %v1004 = vsel %vm413, %v974, 0
      %v1007 = vsel %vm417, %v1001, 0
      %v1010 = vsel %vm417, %v1002, 0
      %1012 = vmatprep.subr.bf16.mxu0 0
      %1013 = vmatpush1.bf16.msra.mxu0 0
      %1014 = vmatprep.subr.bf16.mxu0 0
      %1015 = vmatpush1.bf16.msra.mxu0 0
      %1016 = vmatprep.subr.bf16.mxu0 0
      %1017 = vmatpush1.bf16.msra.mxu0 0
      %1018 = vmatprep.subr.bf16.mxu0 %v1010
      %1019 = vmatpush1.bf16.msra.mxu0 %v1007
      %1020 = vmatprep.subr.bf16.mxu0 %v1000
      %1021 = vmatpush1.bf16.msra.mxu0 %v999
      %1022 = vmatprep.subr.bf16.mxu0 %v998
      %1023 = vmatpush1.bf16.msra.mxu0 %v997
      %1024 = vmatprep.subr.bf16.mxu0 %v996
      %1025 = vmatpush1.bf16.msra.mxu0 %v995
      %1026 = vmatprep.subr.bf16.mxu0 %v994
      %1027 = vmatpush1.bf16.msra.mxu0 %v993
      %1028 = vmatprep.subr.bf16.mxu0 0
      %1029 = vmatpush2.bf16.msra.mxu0 0
      %1030 = vmatprep.subr.bf16.mxu0 0
      %1031 = vmatpush2.bf16.msra.mxu0 0
      %1032 = vmatprep.subr.bf16.mxu0 0
      %1033 = vmatpush2.bf16.msra.mxu0 0
      %1034 = vmatprep.subr.bf16.mxu0 0
      %1035 = vmatpush2.bf16.msra.mxu0 0
      %1036 = vmatprep.subr.bf16.mxu0 0
      %1037 = vmatpush2.bf16.msra.mxu0 0
      %1038 = vmatprep.subr.bf16.mxu0 0
      %1039 = vmatpush2.bf16.msra.mxu0 0
      %1040 = vmatprep.subr.bf16.mxu0 0
      %1041 = vmatpush2.bf16.msra.mxu0 0
      %1042 = vmatprep.subr.bf16.mxu0 0
      %1043 = vmatpush2.bf16.msra.mxu0 0
      %1044 = vmatprep.mubr.bf16.mxu0 0
      %1045 = vmatmul.mubr.bf16.gmra.mxu0 %v1004
      %v1046 = vpop.f32.mrf.mxu0
      %v1047 = vadd.f32 0.0, %v1046
      %v1048 = vpop.f32.mrf.mxu0
      %v1049 = vadd.f32 0.0, %v1048
      %v1050 = vpop.f32.mrf.mxu0
      %v1051 = vpop.f32.mrf.mxu0
      %1052 = vdwg.mxu0
      %s1053 = scalar_lea.vmem %s227, 24
      %v1054 = vld [vmem:[%s1053] sm:$0xff]
      %1056 = vset.pattern.permute.xlu0 0
      %1057 = vperm.xlu0 %1056, %v1054
      %v1058 = vpop.permute.xlu0 %1057
      %v1060 = vmul.f32 %v1047, %v1058
      %v1061 = vmul.f32 %v1049, %v1058
      %s1062 = scalar_lea.vmem %s232, 24
      %v1063 = vld [vmem:[%s1062] sm:$0xff]
      %1065 = vset.pattern.permute.xlu0 0
      %1066 = vperm.xlu0 %1065, %v1063
      %v1067 = vpop.permute.xlu0 %1066
      %v1069 = vadd.f32 %v1060, %v1067
      %v1070 = vadd.f32 %v1061, %v1067
      %v1071 = vadd.f32 %v679, %v1069
      %v1072 = vadd.f32 %v680, %v1070
      %v1073 = vmax.f32 %v1071, 0.0
      %v1074 = vmax.f32 %v1072, 0.0
      %1075 = vst [vmem:[%s237] sm:$0xff] %v1073
      %1076 = vst [vmem:[%s237 + $0x8] sm:$0xff] %v1074
      %p1077 = scmp.lt.s32.totalorder %s15, 1
      %s1078 = scalar_select %p1077, %s15, 1
      %s1079 = smul.addr %s1078, 2
      %s1080 = smul.addr %s1079, 8
      %s1081 = scalar_lea.vmem %s4, %s1080
      // Predicated region
      $region37: #{bnet_forward.1} parent=35 // pred_check
        %p1082 = pneg %p132
      $region38: #{bnet_forward.1} parent=35 // pred_check_branch
        %1084 = sbr.rel (%p1082) target = $region40
      $region39: #{bnet_forward.1} parent=35 // pred_region
        _
      $region40: #{bnet_forward.1} parent=35 // pred_fallthru
        _
    $region36: #{bnet_forward.1} parent=5 // pred_fallthru
      _
    %p1085 = scmp.le.s32.totalorder 2, %s10
    // Predicated region
    $region41: #{bnet_forward.1} parent=5 // pred_check
      %p1086 = pneg %p1085
    $region42: #{bnet_forward.1} parent=5 // pred_check_branch
      %1088 = sbr.rel (%p1086) target = $region44
    $region43: #{bnet_forward.1} parent=5 // pred_region
      %s1089 = ssub.s32 %s10, 2
      // Predicated region
      $region45: #{bnet_forward.1} parent=43 // pred_check
        %p1090 = pneg %p138
      $region46: #{bnet_forward.1} parent=43 // pred_check_branch
        %1092 = sbr.rel (%p1090) target = $region48
      $region47: #{bnet_forward.1} parent=43 // pred_region
        %p1093 = scmp.lt.s32.totalorder %s16, 1
        %s1094 = scalar_select %p1093, %s16, 1
        %s1095 = smul.addr %s1094, 2
        %s1096 = smul.addr %s1095, 8
        %s1097 = scalar_lea.vmem %s4, %s1096
      $region48: #{bnet_forward.1} parent=43 // pred_fallthru
        _
    $region44: #{bnet_forward.1} parent=5 // pred_fallthru
      _
  $region6: #{bnet_forward.1} parent=0 // loop_footer
    %s14 = sadd.s32 1, %s10
  $region7: #{bnet_forward.1} parent=0 // loop_footer_branch
    %9 = sbr.rel target = $region3
  $region8: #{bnet_forward.1} parent=0 // loop_exit
    _

</llo_original>
